<compile_context>
chip_gen: v7x
topology: tpu7x:2x2x1
jax: 0.10.0
libtpu: 0.0.40
codegen_flags: <defaults>
</compile_context>

<pallas_src>
import functools

import jax
import jax.numpy as jnp
from jax.experimental import pallas as pl
from jax.experimental.pallas import tpu as pltpu  # noqa: F401  (TPU backend)


def _round_up(x, m):
    return (x + m - 1) // m * m


# ----------------------------------------------------------------------------
# Fused kernel: gather + im2col + conv + bias + ReLU + max-pool + classifier + CE
# ----------------------------------------------------------------------------
def _fused_kernel(ids_win_ref, table_ref, conv_w_ref, conv_b_ref, time_mask_ref,
                  cls_w_ref, cls_b_ref, tgt_ref, logits_ref, loss_ref, *,
                  num_classes):
    k_max, B, L = ids_win_ref.shape          # (5, B, L) shifted token ids
    Vp, E = table_ref.shape                  # vocab padded to 128, emb dim
    D = conv_w_ref.shape[1]                  # 3 * num_filters (lane-dense)
    Cp = cls_w_ref.shape[1]                  # num_classes padded to 128

    table = table_ref[...]                   # (Vp, E) f32

    # --- fused embedding gather + im2col window build (one-hot matmuls) ------
    parts = []
    for j in range(k_max):                   # static unroll, k_max = 5
        idj = ids_win_ref[j]                 # (B, L) int32 == ids[:, t+j]
        onehot = (jax.lax.broadcasted_iota(jnp.int32, (B, L, Vp), 2)
                  == idj[:, :, None]).astype(jnp.float32)       # (B, L, Vp)
        parts.append(jax.lax.dot_general(
            onehot, table, (((2,), (0,)), ((), ())),
            preferred_element_type=jnp.float32))                # (B, L, E)
    windows = jnp.concatenate(parts, axis=-1)                   # (B, L, k_max*E)

    # --- all conv filter sizes in ONE MXU matmul (K = k_max*E, N = 3F) -------
    conv = jax.lax.dot_general(
        windows, conv_w_ref[...], (((2,), (0,)), ((), ())),
        preferred_element_type=jnp.float32)                     # (B, L, D)
    conv = conv + conv_b_ref[...][None, :, :]                   # conv bias
    conv = jnp.maximum(conv, 0.0)                               # ReLU
    conv = conv * time_mask_ref[...][None, :, :]                # kill t >= L_out_k
    feat = jnp.max(conv, axis=1)                                # (B, D) pooled+concat

    # --- classifier (output padded to Cp = 128 lanes) -------------------------
    logits = jnp.dot(feat, cls_w_ref[...],
                     preferred_element_type=jnp.float32) + cls_b_ref[...]
    logits_ref[...] = logits                                    # (B, Cp)

    # --- mean cross entropy over the first `num_classes` columns -------------
    col = jax.lax.broadcasted_iota(jnp.int32, (B, Cp), 1)
    masked = jnp.where(col < num_classes, logits, jnp.float32(-1e30))
    m = jnp.max(masked, axis=1, keepdims=True)                  # (B, 1)
    lse = jnp.log(jnp.sum(jnp.exp(masked - m), axis=1, keepdims=True)) + m
    onehot_t = (col == tgt_ref[...]).astype(jnp.float32)        # (B, Cp)
    tgt_logit = jnp.sum(onehot_t * logits, axis=1, keepdims=True)
    loss_ref[...] = jnp.mean(lse - tgt_logit, axis=0, keepdims=True)  # (1, 1)


# ----------------------------------------------------------------------------
# Wrapper: parameter packing (cheap XLA ops under jit) + single pallas_call
# ----------------------------------------------------------------------------
def text_cnn_forward(params, input_ids, input_mask, target, *,
                     filter_sizes, num_classes):
    del input_mask  # unused by the reference forward()

    table = params["embedding"]                       # (V, E)
    V, E = table.shape
    B, L = input_ids.shape
    F = params[f"conv_b_{filter_sizes[0]}"].shape[0]  # num_filters
    n_f = len(filter_sizes)
    k_max = max(filter_sizes)
    D = n_f * F
    C = num_classes
    Vp = _round_up(V, 128)
    Cp = _round_up(C, 128)

    # Pad vocab so the one-hot gather is a full-lane K=128 MXU pass.
    table_p = jnp.pad(table, ((0, Vp - V), (0, 0)))             # (Vp, E)

    # Combined conv weight: zero-pad each filter to k_max taps, concat on F.
    w_blocks = []
    for k in filter_sizes:
        w = params[f"conv_w_{k}"]                               # (k, E, F)
        w = jnp.pad(w, ((0, k_max - k), (0, 0), (0, 0)))        # (k_max, E, F)
        w_blocks.append(w.reshape(k_max * E, F))
    conv_w = jnp.concatenate(w_blocks, axis=1)                  # (k_max*E, D)
    conv_b = jnp.concatenate(
        [params[f"conv_b_{k}"] for k in filter_sizes]).reshape(1, D)

    # Per-lane time-validity mask: lane block i is valid for t < L - k_i + 1.
    t_idx = jnp.arange(L, dtype=jnp.int32)[:, None]             # (L, 1)
    lims = jnp.concatenate(
        [jnp.full((F,), L - k + 1, jnp.int32) for k in filter_sizes]
    ).reshape(1, D)
    time_mask = (t_idx < lims).astype(jnp.float32)              # (L, D)

    # Classifier padded to a lane-dense 128-wide output.
    cls_w_p = jnp.pad(params["cls_w"], ((0, 0), (0, Cp - C)))   # (D, Cp)
    cls_b_p = jnp.pad(params["cls_b"], (0, Cp - C)).reshape(1, Cp)

    # im2col on token ids (cheap int ops): ids_win[j, b, t] = ids[b, t+j]
    # (positions past the sequence get dummy id 0; they are masked out).
    shifted = [input_ids]
    for j in range(1, k_max):
        shifted.append(jnp.concatenate(
            [input_ids[:, j:], jnp.zeros((B, j), input_ids.dtype)], axis=1))
    ids_win = jnp.stack(shifted, axis=0).astype(jnp.int32)      # (k_max, B, L)

    tgt = target.reshape(B, 1).astype(jnp.int32)

    kernel = functools.partial(_fused_kernel, num_classes=C)
    logits_p, loss = pl.pallas_call(
        kernel,
        out_shape=(jax.ShapeDtypeStruct((B, Cp), jnp.float32),
                   jax.ShapeDtypeStruct((1, 1), jnp.float32)),
        in_specs=[
            pl.BlockSpec((k_max, B, L), lambda: (0, 0, 0)),
            pl.BlockSpec((Vp, E), lambda: (0, 0)),
            pl.BlockSpec((k_max * E, D), lambda: (0, 0)),
            pl.BlockSpec((1, D), lambda: (0, 0)),
            pl.BlockSpec((L, D), lambda: (0, 0)),
            pl.BlockSpec((D, Cp), lambda: (0, 0)),
            pl.BlockSpec((1, Cp), lambda: (0, 0)),
            pl.BlockSpec((B, 1), lambda: (0, 0)),
        ],
        out_specs=(
            pl.BlockSpec((B, Cp), lambda: (0, 0)),
            pl.BlockSpec((1, 1), lambda: (0, 0)),
        ),
    )(ids_win, table_p, conv_w, conv_b, time_mask, cls_w_p, cls_b_p, tgt)

    return loss[0, 0], logits_p[:, :C]


# ----------------------------------------------------------------------------
# Pure-JAX reference (for correctness check) and parameter init
# ----------------------------------------------------------------------------
def _reference_forward(params, input_ids, target, filter_sizes):
    emb = params["embedding"][input_ids]                        # (B, L, E)
    feats = []
    for k in filter_sizes:
        w = params[f"conv_w_{k}"]                               # (k, E, F)
        b = params[f"conv_b_{k}"]
        L_out = emb.shape[1] - k + 1
        conv = sum(jnp.einsum("ble,ef->blf", emb[:, j:j + L_out, :], w[j])
                   for j in range(k)) + b
        feats.append(jnp.max(jax.nn.relu(conv), axis=1))
    feat = jnp.concatenate(feats, axis=1)
    logits = feat @ params["cls_w"] + params["cls_b"]
    logp = jax.nn.log_softmax(logits, axis=-1)
    loss = -jnp.mean(logp[jnp.arange(logits.shape[0]), target])
    return loss, logits


def init_params(key, vocab_size, embedding_size, num_classes,
                num_filters, filter_sizes):
    keys = jax.random.split(key, 2 + 2 * len(filter_sizes) + 2)
    params = {}
    params["embedding"] = jax.random.normal(
        keys[0], (vocab_size, embedding_size), jnp.float32)
    for i, k in enumerate(filter_sizes):
        params[f"conv_w_{k}"] = 0.1 * jax.random.normal(
            keys[1 + 2 * i], (k, embedding_size, num_filters), jnp.float32)
        params[f"conv_b_{k}"] = 0.01 * jax.random.normal(
            keys[2 + 2 * i], (num_filters,), jnp.float32)
    D = num_filters * len(filter_sizes)
    params["cls_w"] = 0.05 * jax.random.normal(
        keys[-2], (D, num_classes), jnp.float32)
    params["cls_b"] = 0.01 * jax.random.normal(
        keys[-1], (num_classes,), jnp.float32)
    return params


if __name__ == "__main__":
    vocab_size = 100
    embedding_size = 32
    num_classes = 8
    num_filters = 128
    filter_sizes = (3, 4, 5)
    B, L = 4, 16

    key = jax.random.PRNGKey(0)
    k_params, k_ids, k_tgt = jax.random.split(key, 3)

    params = init_params(k_params, vocab_size, embedding_size,
                         num_classes, num_filters, filter_sizes)
    input_ids = jax.random.randint(k_ids, (B, L), 0, vocab_size, jnp.int32)
    input_mask = jnp.ones((B, L), jnp.int32)
    target = jax.random.randint(k_tgt, (B,), 0, num_classes, jnp.int32)

    fwd = jax.jit(text_cnn_forward,
                  static_argnames=("filter_sizes", "num_classes"))
    loss, logits = fwd(params, input_ids, input_mask, target,
                       filter_sizes=filter_sizes, num_classes=num_classes)
    jax.block_until_ready((loss, logits))

    # Correctness check against a pure-JAX reference.
    ref_loss, ref_logits = _reference_forward(params, input_ids, target,
                                              filter_sizes)
    assert logits.shape == (B, num_classes)
    assert loss.shape == ()
    assert bool(jnp.isfinite(loss))
    assert jnp.allclose(logits, ref_logits, rtol=1e-2, atol=1e-2)
    assert jnp.allclose(loss, ref_loss, rtol=1e-2, atol=1e-2)
    print("KERNEL_OK")
</pallas_src>

<mosaic_0001>
module attributes {stable_mosaic.version = 11 : i64} {
  func.func @_fused_kernel(%arg0: memref<5x4x16xi32, #tpu.memory_space<vmem>>, %arg1: memref<128x32xf32, #tpu.memory_space<vmem>>, %arg2: memref<160x384xf32, #tpu.memory_space<vmem>>, %arg3: memref<1x384xf32, #tpu.memory_space<vmem>>, %arg4: memref<16x384xf32, #tpu.memory_space<vmem>>, %arg5: memref<384x128xf32, #tpu.memory_space<vmem>>, %arg6: memref<1x128xf32, #tpu.memory_space<vmem>>, %arg7: memref<4x1xi32, #tpu.memory_space<vmem>>, %arg8: memref<4x128xf32, #tpu.memory_space<vmem>>, %arg9: memref<1x1xf32, #tpu.memory_space<vmem>>) attributes {dimension_semantics = [], scalar_prefetch = 0 : i64, scratch_operands = 0 : i64, tpu.core_type = #tpu.core_type<tc>} {
    %c0 = arith.constant 0 : index
    %c0_0 = arith.constant 0 : index
    %0 = vector.load %arg1[%c0, %c0_0] : memref<128x32xf32, #tpu.memory_space<vmem>>, vector<128x32xf32>
    %c0_1 = arith.constant 0 : index
    %c0_2 = arith.constant 0 : index
    %c0_3 = arith.constant 0 : index
    %1 = vector.load %arg0[%c0_1, %c0_2, %c0_3] : memref<5x4x16xi32, #tpu.memory_space<vmem>>, vector<1x4x16xi32>
    %2 = vector.shape_cast %1 : vector<1x4x16xi32> to vector<4x16xi32>
    %3 = tpu.iota {dimensions = array<i32: 2>} : vector<4x16x128xi32>
    %4 = vector.shape_cast %2 : vector<4x16xi32> to vector<4x16x1xi32>
    %5 = vector.broadcast %4 : vector<4x16x1xi32> to vector<4x16x128xi32>
    %6 = arith.cmpi eq, %3, %5 : vector<4x16x128xi32>
    %7 = arith.extui %6 : vector<4x16x128xi1> to vector<4x16x128xi32>
    %8 = arith.sitofp %7 : vector<4x16x128xi32> to vector<4x16x128xf32>
    %cst = arith.constant dense<0.000000e+00> : vector<4x16x32xf32>
    %9 = tpu.matmul %8, %0, %cst {dimension_numbers = #tpu.dot_dimension_numbers<[2], [0], [0, 1], [1], [0, 0, 0, 1, 1, 1], [], []>} : vector<4x16x128xf32>, vector<128x32xf32>, vector<4x16x32xf32> -> vector<4x16x32xf32>
    %c1 = arith.constant 1 : index
    %c0_4 = arith.constant 0 : index
    %c0_5 = arith.constant 0 : index
    %10 = vector.load %arg0[%c1, %c0_4, %c0_5] : memref<5x4x16xi32, #tpu.memory_space<vmem>>, vector<1x4x16xi32>
    %11 = vector.shape_cast %10 : vector<1x4x16xi32> to vector<4x16xi32>
    %12 = tpu.iota {dimensions = array<i32: 2>} : vector<4x16x128xi32>
    %13 = vector.shape_cast %11 : vector<4x16xi32> to vector<4x16x1xi32>
    %14 = vector.broadcast %13 : vector<4x16x1xi32> to vector<4x16x128xi32>
    %15 = arith.cmpi eq, %12, %14 : vector<4x16x128xi32>
    %16 = arith.extui %15 : vector<4x16x128xi1> to vector<4x16x128xi32>
    %17 = arith.sitofp %16 : vector<4x16x128xi32> to vector<4x16x128xf32>
    %cst_6 = arith.constant dense<0.000000e+00> : vector<4x16x32xf32>
    %18 = tpu.matmul %17, %0, %cst_6 {dimension_numbers = #tpu.dot_dimension_numbers<[2], [0], [0, 1], [1], [0, 0, 0, 1, 1, 1], [], []>} : vector<4x16x128xf32>, vector<128x32xf32>, vector<4x16x32xf32> -> vector<4x16x32xf32>
    %c2 = arith.constant 2 : index
    %c0_7 = arith.constant 0 : index
    %c0_8 = arith.constant 0 : index
    %19 = vector.load %arg0[%c2, %c0_7, %c0_8] : memref<5x4x16xi32, #tpu.memory_space<vmem>>, vector<1x4x16xi32>
    %20 = vector.shape_cast %19 : vector<1x4x16xi32> to vector<4x16xi32>
    %21 = tpu.iota {dimensions = array<i32: 2>} : vector<4x16x128xi32>
    %22 = vector.shape_cast %20 : vector<4x16xi32> to vector<4x16x1xi32>
    %23 = vector.broadcast %22 : vector<4x16x1xi32> to vector<4x16x128xi32>
    %24 = arith.cmpi eq, %21, %23 : vector<4x16x128xi32>
    %25 = arith.extui %24 : vector<4x16x128xi1> to vector<4x16x128xi32>
    %26 = arith.sitofp %25 : vector<4x16x128xi32> to vector<4x16x128xf32>
    %cst_9 = arith.constant dense<0.000000e+00> : vector<4x16x32xf32>
    %27 = tpu.matmul %26, %0, %cst_9 {dimension_numbers = #tpu.dot_dimension_numbers<[2], [0], [0, 1], [1], [0, 0, 0, 1, 1, 1], [], []>} : vector<4x16x128xf32>, vector<128x32xf32>, vector<4x16x32xf32> -> vector<4x16x32xf32>
    %c3 = arith.constant 3 : index
    %c0_10 = arith.constant 0 : index
    %c0_11 = arith.constant 0 : index
    %28 = vector.load %arg0[%c3, %c0_10, %c0_11] : memref<5x4x16xi32, #tpu.memory_space<vmem>>, vector<1x4x16xi32>
    %29 = vector.shape_cast %28 : vector<1x4x16xi32> to vector<4x16xi32>
    %30 = tpu.iota {dimensions = array<i32: 2>} : vector<4x16x128xi32>
    %31 = vector.shape_cast %29 : vector<4x16xi32> to vector<4x16x1xi32>
    %32 = vector.broadcast %31 : vector<4x16x1xi32> to vector<4x16x128xi32>
    %33 = arith.cmpi eq, %30, %32 : vector<4x16x128xi32>
    %34 = arith.extui %33 : vector<4x16x128xi1> to vector<4x16x128xi32>
    %35 = arith.sitofp %34 : vector<4x16x128xi32> to vector<4x16x128xf32>
    %cst_12 = arith.constant dense<0.000000e+00> : vector<4x16x32xf32>
    %36 = tpu.matmul %35, %0, %cst_12 {dimension_numbers = #tpu.dot_dimension_numbers<[2], [0], [0, 1], [1], [0, 0, 0, 1, 1, 1], [], []>} : vector<4x16x128xf32>, vector<128x32xf32>, vector<4x16x32xf32> -> vector<4x16x32xf32>
    %c4 = arith.constant 4 : index
    %c0_13 = arith.constant 0 : index
    %c0_14 = arith.constant 0 : index
    %37 = vector.load %arg0[%c4, %c0_13, %c0_14] : memref<5x4x16xi32, #tpu.memory_space<vmem>>, vector<1x4x16xi32>
    %38 = vector.shape_cast %37 : vector<1x4x16xi32> to vector<4x16xi32>
    %39 = tpu.iota {dimensions = array<i32: 2>} : vector<4x16x128xi32>
    %40 = vector.shape_cast %38 : vector<4x16xi32> to vector<4x16x1xi32>
    %41 = vector.broadcast %40 : vector<4x16x1xi32> to vector<4x16x128xi32>
    %42 = arith.cmpi eq, %39, %41 : vector<4x16x128xi32>
    %43 = arith.extui %42 : vector<4x16x128xi1> to vector<4x16x128xi32>
    %44 = arith.sitofp %43 : vector<4x16x128xi32> to vector<4x16x128xf32>
    %cst_15 = arith.constant dense<0.000000e+00> : vector<4x16x32xf32>
    %45 = tpu.matmul %44, %0, %cst_15 {dimension_numbers = #tpu.dot_dimension_numbers<[2], [0], [0, 1], [1], [0, 0, 0, 1, 1, 1], [], []>} : vector<4x16x128xf32>, vector<128x32xf32>, vector<4x16x32xf32> -> vector<4x16x32xf32>
    %46 = tpu.concatenate %9, %18, %27, %36, %45 in 2 : vector<4x16x32xf32>, vector<4x16x32xf32>, vector<4x16x32xf32>, vector<4x16x32xf32>, vector<4x16x32xf32> -> vector<4x16x160xf32>
    %c0_16 = arith.constant 0 : index
    %c0_17 = arith.constant 0 : index
    %47 = vector.load %arg2[%c0_16, %c0_17] : memref<160x384xf32, #tpu.memory_space<vmem>>, vector<160x384xf32>
    %cst_18 = arith.constant dense<0.000000e+00> : vector<4x16x384xf32>
    %48 = tpu.matmul %46, %47, %cst_18 {dimension_numbers = #tpu.dot_dimension_numbers<[2], [0], [0, 1], [1], [0, 0, 0, 1, 1, 1], [], []>} : vector<4x16x160xf32>, vector<160x384xf32>, vector<4x16x384xf32> -> vector<4x16x384xf32>
    %c0_19 = arith.constant 0 : index
    %c0_20 = arith.constant 0 : index
    %49 = vector.load %arg3[%c0_19, %c0_20] : memref<1x384xf32, #tpu.memory_space<vmem>>, vector<1x384xf32>
    %50 = vector.shape_cast %49 : vector<1x384xf32> to vector<1x1x384xf32>
    %51 = vector.broadcast %50 : vector<1x1x384xf32> to vector<4x16x384xf32>
    %52 = arith.addf %48, %51 : vector<4x16x384xf32>
    %cst_21 = arith.constant 0.000000e+00 : f32
    %53 = vector.broadcast %cst_21 : f32 to vector<4x16x384xf32>
    %54 = arith.maximumf %52, %53 : vector<4x16x384xf32>
    %c0_22 = arith.constant 0 : index
    %c0_23 = arith.constant 0 : index
    %55 = vector.load %arg4[%c0_22, %c0_23] : memref<16x384xf32, #tpu.memory_space<vmem>>, vector<16x384xf32>
    %56 = vector.shape_cast %55 : vector<16x384xf32> to vector<1x16x384xf32>
    %57 = vector.broadcast %56 : vector<1x16x384xf32> to vector<4x16x384xf32>
    %58 = arith.mulf %54, %57 : vector<4x16x384xf32>
    %cst_24 = arith.constant dense<0xFF800000> : vector<4x384xf32>
    %59 = vector.multi_reduction <maximumf>, %58, %cst_24 [1] : vector<4x16x384xf32> to vector<4x384xf32>
    %c0_25 = arith.constant 0 : index
    %c0_26 = arith.constant 0 : index
    %60 = vector.load %arg5[%c0_25, %c0_26] : memref<384x128xf32, #tpu.memory_space<vmem>>, vector<384x128xf32>
    %cst_27 = arith.constant dense<0.000000e+00> : vector<4x128xf32>
    %61 = tpu.matmul %59, %60, %cst_27 {dimension_numbers = #tpu.dot_dimension_numbers<[1], [0], [0], [1], [0, 0, 1, 1], [], []>} : vector<4x384xf32>, vector<384x128xf32>, vector<4x128xf32> -> vector<4x128xf32>
    %c0_28 = arith.constant 0 : index
    %c0_29 = arith.constant 0 : index
    %62 = vector.load %arg6[%c0_28, %c0_29] : memref<1x128xf32, #tpu.memory_space<vmem>>, vector<1x128xf32>
    %63 = vector.broadcast %62 : vector<1x128xf32> to vector<4x128xf32>
    %64 = arith.addf %61, %63 : vector<4x128xf32>
    %c0_30 = arith.constant 0 : index
    %c0_31 = arith.constant 0 : index
    %65 = vector.load %arg8[%c0_30, %c0_31] : memref<4x128xf32, #tpu.memory_space<vmem>>, vector<4x128xf32>
    tpu.vector_store %arg8[%c0_30, %c0_31], %64 {strides = array<i32>} : memref<4x128xf32, #tpu.memory_space<vmem>>, vector<4x128xf32>,
    %66 = tpu.iota {dimensions = array<i32: 1>} : vector<4x128xi32>
    %c8_i32 = arith.constant 8 : i32
    %67 = vector.broadcast %c8_i32 : i32 to vector<4x128xi32>
    %68 = arith.cmpi slt, %66, %67 : vector<4x128xi32>
    %cst_32 = arith.constant -1.000000e+30 : f32
    %69 = vector.broadcast %cst_32 : f32 to vector<4x128xf32>
    %70 = arith.select %68, %64, %69 : vector<4x128xi1>, vector<4x128xf32>
    %cst_33 = arith.constant dense<0xFF800000> : vector<4xf32>
    %71 = vector.multi_reduction <maximumf>, %70, %cst_33 [1] : vector<4x128xf32> to vector<4xf32>
    %72 = vector.shape_cast %71 : vector<4xf32> to vector<4x1xf32>
    %73 = vector.broadcast %72 : vector<4x1xf32> to vector<4x128xf32>
    %74 = arith.subf %70, %73 : vector<4x128xf32>
    %75 = math.exp %74 : vector<4x128xf32>
    %cst_34 = arith.constant dense<0.000000e+00> : vector<4xf32>
    %76 = vector.multi_reduction <add>, %75, %cst_34 [1] : vector<4x128xf32> to vector<4xf32>
    %77 = vector.shape_cast %76 : vector<4xf32> to vector<4x1xf32>
    %78 = math.log %77 : vector<4x1xf32>
    %79 = arith.addf %78, %72 : vector<4x1xf32>
    %c0_35 = arith.constant 0 : index
    %c0_36 = arith.constant 0 : index
    %80 = vector.load %arg7[%c0_35, %c0_36] : memref<4x1xi32, #tpu.memory_space<vmem>>, vector<4x1xi32>
    %81 = vector.broadcast %80 : vector<4x1xi32> to vector<4x128xi32>
    %82 = arith.cmpi eq, %66, %81 : vector<4x128xi32>
    %83 = arith.extui %82 : vector<4x128xi1> to vector<4x128xi32>
    %84 = arith.sitofp %83 : vector<4x128xi32> to vector<4x128xf32>
    %85 = arith.mulf %84, %64 : vector<4x128xf32>
    %cst_37 = arith.constant dense<0.000000e+00> : vector<4xf32>
    %86 = vector.multi_reduction <add>, %85, %cst_37 [1] : vector<4x128xf32> to vector<4xf32>
    %87 = vector.shape_cast %86 : vector<4xf32> to vector<4x1xf32>
    %88 = arith.subf %79, %87 : vector<4x1xf32>
    %cst_38 = arith.constant dense<0.000000e+00> : vector<1xf32>
    %89 = vector.multi_reduction <add>, %88, %cst_38 [0] : vector<4x1xf32> to vector<1xf32>
    %90 = vector.shape_cast %89 : vector<1xf32> to vector<1x1xf32>
    %cst_39 = arith.constant 4.000000e+00 : f32
    %91 = vector.broadcast %cst_39 : f32 to vector<1x1xf32>
    %92 = arith.divf %90, %91 : vector<1x1xf32>
    %c0_40 = arith.constant 0 : index
    %c0_41 = arith.constant 0 : index
    %93 = vector.load %arg9[%c0_40, %c0_41] : memref<1x1xf32, #tpu.memory_space<vmem>>, vector<1x1xf32>
    tpu.vector_store %arg9[%c0_40, %c0_41], %92 {strides = array<i32>} : memref<1x1xf32, #tpu.memory_space<vmem>>, vector<1x1xf32>,
    return
  }
}

</mosaic_0001>

<llo_original>
// kernel: text_cnn_forward.1
$region0: #{text_cnn_forward.1}
  #allocation0 [shape = 'u32[]', space=smem, size = 0x4, offset = 0x4, fixed_abs, tag = 'smem constant byte address 0x4 - core index']
  #allocation1 [shape = 'u32[144,128]{1,0:T(1,128)}', space=vmem, size = 0x12000, scoped, tag = 'internal scratch']
  %s0 = inlined_call_operand.vmem [shape: s32[5,4,16], index: 0, kind: input, shape index: {}]
  %s1 = inlined_call_operand.vmem [shape: f32[128,32], index: 1, kind: input, shape index: {}]
  %s2 = inlined_call_operand.vmem [shape: f32[160,384], index: 2, kind: input, shape index: {}]
  %s3 = inlined_call_operand.vmem [shape: f32[1,384], index: 3, kind: input, shape index: {}]
  %s4 = inlined_call_operand.vmem [shape: f32[16,384], index: 4, kind: input, shape index: {}]
  %s5 = inlined_call_operand.vmem [shape: f32[384,128], index: 5, kind: input, shape index: {}]
  %s6 = inlined_call_operand.vmem [shape: f32[1,128], index: 6, kind: input, shape index: {}]
  %s7 = inlined_call_operand.vmem [shape: s32[4,1], index: 7, kind: input, shape index: {}]
  %s8 = inlined_call_operand.hbm [shape: f32[4,128], index: 8, kind: output, shape index: {0}]
  %s9 = inlined_call_operand.hbm [shape: f32[1,1], index: 9, kind: output, shape index: {1}]
  %10 = xla_tuple %s8, %s9
  %s11 = sld [smem:[#allocation0]]
  $region50: #{text_cnn_forward.1} parent=0
    _
  %s13 = ssub.s32 1, %s11
  %s14 = scalar_select 0, %s13, %s11
  $region1: #{text_cnn_forward.1} parent=0
    #allocation2 [shape = 'u8[2048]{0}', space=vmem, size = 0x800, scoped, tag = 'output window, operand 0, single buffered']
    #allocation3 [shape = 's32[1]{0}', space=sflag, size = 0x4, scoped, tag = 'scoped memory for text_cnn_forward.1']
    #allocation4 [shape = 'u8[512]{0}', space=vmem, size = 0x400, scoped, tag = 'output window, operand 1, single buffered']
    #allocation5 [shape = 's32[1]{0}', space=sflag, size = 0x4, scoped, tag = 'scoped memory for text_cnn_forward.1']
    %15 = vsyncpa [#allocation3], 0
    %16 = vsyncpa [#allocation5], 0
    // Predicated region
    $region2: #{text_cnn_forward.1} parent=1 // pred_check
      _
    $region3: #{text_cnn_forward.1} parent=1 // pred_check_branch
      %18 = sbr.rel (0) target = $region5
    $region4: #{text_cnn_forward.1} parent=1 // pred_region
      _
    $region5: #{text_cnn_forward.1} parent=1 // pred_fallthru
      _
    // Predicated region
    $region6: #{text_cnn_forward.1} parent=1 // pred_check
      _
    $region7: #{text_cnn_forward.1} parent=1 // pred_check_branch
      %20 = sbr.rel (0) target = $region9
    $region8: #{text_cnn_forward.1} parent=1 // pred_region
      _
    $region9: #{text_cnn_forward.1} parent=1 // pred_fallthru
      _
    // Predicated region
    $region10: #{text_cnn_forward.1} parent=1 // pred_check
      _
    $region11: #{text_cnn_forward.1} parent=1 // pred_check_branch
      %22 = sbr.rel (0) target = $region13
    $region12: #{text_cnn_forward.1} parent=1 // pred_region
      _
    $region13: #{text_cnn_forward.1} parent=1 // pred_fallthru
      _
    // Predicated region
    $region14: #{text_cnn_forward.1} parent=1 // pred_check
      _
    $region15: #{text_cnn_forward.1} parent=1 // pred_check_branch
      %24 = sbr.rel (0) target = $region17
    $region16: #{text_cnn_forward.1} parent=1 // pred_region
      _
    $region17: #{text_cnn_forward.1} parent=1 // pred_fallthru
      _
    // Predicated region
    $region18: #{text_cnn_forward.1} parent=1 // pred_check
      _
    $region19: #{text_cnn_forward.1} parent=1 // pred_check_branch
      %26 = sbr.rel (0) target = $region21
    $region20: #{text_cnn_forward.1} parent=1 // pred_region
      _
    $region21: #{text_cnn_forward.1} parent=1 // pred_fallthru
      _
    // Predicated region
    $region22: #{text_cnn_forward.1} parent=1 // pred_check
      _
    $region23: #{text_cnn_forward.1} parent=1 // pred_check_branch
      %28 = sbr.rel (0) target = $region25
    $region24: #{text_cnn_forward.1} parent=1 // pred_region
      _
    $region25: #{text_cnn_forward.1} parent=1 // pred_fallthru
      _
    // Predicated region
    $region26: #{text_cnn_forward.1} parent=1 // pred_check
      _
    $region27: #{text_cnn_forward.1} parent=1 // pred_check_branch
      %30 = sbr.rel (0) target = $region29
    $region28: #{text_cnn_forward.1} parent=1 // pred_region
      _
    $region29: #{text_cnn_forward.1} parent=1 // pred_fallthru
      _
    // Predicated region
    $region30: #{text_cnn_forward.1} parent=1 // pred_check
      _
    $region31: #{text_cnn_forward.1} parent=1 // pred_check_branch
      %32 = sbr.rel (0) target = $region33
    $region32: #{text_cnn_forward.1} parent=1 // pred_region
      _
    $region33: #{text_cnn_forward.1} parent=1 // pred_fallthru
      _
    %v33 = vld [vmem:[%s1] sm:$0xff]
    %v34 = vld [vmem:[%s1 + $0x8] sm:$0xff]
    %v35 = vld [vmem:[%s1 + $0x10] sm:$0xff]
    %v36 = vld [vmem:[%s1 + $0x18] sm:$0xff]
    %v37 = vld [vmem:[%s1 + $0x20] sm:$0xff]
    %v38 = vld [vmem:[%s1 + $0x28] sm:$0xff]
    %v39 = vld [vmem:[%s1 + $0x30] sm:$0xff]
    %v40 = vld [vmem:[%s1 + $0x38] sm:$0xff]
    %v41 = vld [vmem:[%s1 + $0x40] sm:$0xff]
    %v42 = vld [vmem:[%s1 + $0x48] sm:$0xff]
    %v43 = vld [vmem:[%s1 + $0x50] sm:$0xff]
    %v44 = vld [vmem:[%s1 + $0x58] sm:$0xff]
    %v45 = vld [vmem:[%s1 + $0x60] sm:$0xff]
    %v46 = vld [vmem:[%s1 + $0x68] sm:$0xff]
    %v47 = vld [vmem:[%s1 + $0x70] sm:$0xff]
    %v48 = vld [vmem:[%s1 + $0x78] sm:$0xff]
    %v49 = vld [vmem:[%s0] sm:$0xf]
    %v50 = vlaneseq
    %v51 = vand.u32 %v50, 127
    %v52 = vlaneseq
    %v53 = vshrl.u32 %v52, 7
    %v54 = vsub.s32 0, %v53
    %v55 = vrot.slane %v49, %v54
    %57 = vbcast.lane.b32.xlu0 %v55, 256
    %v58 = vpop.permute.xlu0 %57
    %s60 = sor.u32 256, 8
    %61 = vbcast.lane.b32.xlu0 %v55, %s60
    %v62 = vpop.permute.xlu0 %61
    %v63 = vlaneseq
    %v64 = vshrl.u32 %v63, 7
    %v65 = vsub.s32 1, %v64
    %v66 = vrot.slane %v49, %v65
    %68 = vbcast.lane.b32.xlu0 %v66, 256
    %v69 = vpop.permute.xlu0 %68
    %s71 = sor.u32 256, 8
    %72 = vbcast.lane.b32.xlu0 %v66, %s71
    %v73 = vpop.permute.xlu0 %72
    %v74 = vlaneseq
    %v75 = vshrl.u32 %v74, 7
    %v76 = vsub.s32 2, %v75
    %v77 = vrot.slane %v49, %v76
    %79 = vbcast.lane.b32.xlu0 %v77, 256
    %v80 = vpop.permute.xlu0 %79
    %s82 = sor.u32 256, 8
    %83 = vbcast.lane.b32.xlu0 %v77, %s82
    %v84 = vpop.permute.xlu0 %83
    %v85 = vlaneseq
    %v86 = vshrl.u32 %v85, 7
    %v87 = vsub.s32 3, %v86
    %v88 = vrot.slane %v49, %v87
    %90 = vbcast.lane.b32.xlu0 %v88, 256
    %v91 = vpop.permute.xlu0 %90
    %s93 = sor.u32 256, 8
    %94 = vbcast.lane.b32.xlu0 %v88, %s93
    %v95 = vpop.permute.xlu0 %94
    %vm96 = vcmp.eq.s32.totalorder %v51, %v58
    %vm97 = vcmp.eq.s32.totalorder %v51, %v62
    %vm98 = vcmp.eq.s32.totalorder %v51, %v69
    %vm99 = vcmp.eq.s32.totalorder %v51, %v73
    %vm100 = vcmp.eq.s32.totalorder %v51, %v80
    %vm101 = vcmp.eq.s32.totalorder %v51, %v84
    %vm102 = vcmp.eq.s32.totalorder %v51, %v91
    %vm103 = vcmp.eq.s32.totalorder %v51, %v95
    %v104 = vsel %vm96, 1, 0
    %v105 = vsel %vm97, 1, 0
    %v106 = vsel %vm98, 1, 0
    %v107 = vsel %vm99, 1, 0
    %v108 = vsel %vm100, 1, 0
    %v109 = vsel %vm101, 1, 0
    %v110 = vsel %vm102, 1, 0
    %v111 = vsel %vm103, 1, 0
    %v112 = vcvt.s32.f32 %v104
    %v113 = vcvt.s32.f32 %v105
    %v114 = vcvt.s32.f32 %v106
    %v115 = vcvt.s32.f32 %v107
    %v116 = vcvt.s32.f32 %v108
    %v117 = vcvt.s32.f32 %v109
    %v118 = vcvt.s32.f32 %v110
    %v119 = vcvt.s32.f32 %v111
    %120 = vmatprep.subr.mxu0 0.0
    %121 = vmatpush1.msra.mxu0 %v33
    %122 = vmatprep.subr.mxu0 0.0
    %123 = vmatpush1.msra.mxu0 %v34
    %124 = vmatprep.subr.mxu0 0.0
    %125 = vmatpush1.msra.mxu0 %v35
    %126 = vmatprep.subr.mxu0 0.0
    %127 = vmatpush1.msra.mxu0 %v36
    %128 = vmatprep.subr.mxu0 0.0
    %129 = vmatpush1.msra.mxu0 %v37
    %130 = vmatprep.subr.mxu0 0.0
    %131 = vmatpush1.msra.mxu0 %v38
    %132 = vmatprep.subr.mxu0 0.0
    %133 = vmatpush1.msra.mxu0 %v39
    %134 = vmatprep.subr.mxu0 0.0
    %135 = vmatpush1.msra.mxu0 %v40
    %136 = vmatprep.subr.mxu0 0.0
    %137 = vmatpush1.msra.mxu0 %v41
    %138 = vmatprep.subr.mxu0 0.0
    %139 = vmatpush1.msra.mxu0 %v42
    %140 = vmatprep.subr.mxu0 0.0
    %141 = vmatpush1.msra.mxu0 %v43
    %142 = vmatprep.subr.mxu0 0.0
    %143 = vmatpush1.msra.mxu0 %v44
    %144 = vmatprep.subr.mxu0 0.0
    %145 = vmatpush1.msra.mxu0 %v45
    %146 = vmatprep.subr.mxu0 0.0
    %147 = vmatpush1.msra.mxu0 %v46
    %148 = vmatprep.subr.mxu0 0.0
    %149 = vmatpush1.msra.mxu0 %v47
    %150 = vmatprep.subr.mxu0 0.0
    %151 = vmatpush1.msra.mxu0 %v48
    %152 = vmatprep.subr.mxu0 0.0
    %153 = vmatpush1.msra.mxu0 0.0
    %154 = vmatprep.subr.mxu0 0.0
    %155 = vmatpush1.msra.mxu0 0.0
    %156 = vmatprep.subr.mxu0 0.0
    %157 = vmatpush1.msra.mxu0 0.0
    %158 = vmatprep.subr.mxu0 0.0
    %159 = vmatpush1.msra.mxu0 0.0
    %160 = vmatprep.subr.mxu0 0.0
    %161 = vmatpush1.msra.mxu0 0.0
    %162 = vmatprep.subr.mxu0 0.0
    %163 = vmatpush1.msra.mxu0 0.0
    %164 = vmatprep.subr.mxu0 0.0
    %165 = vmatpush1.msra.mxu0 0.0
    %166 = vmatprep.subr.mxu0 0.0
    %167 = vmatpush1.msra.mxu0 0.0
    %168 = vmatprep.subr.mxu0 0.0
    %169 = vmatpush1.msra.mxu0 0.0
    %170 = vmatprep.subr.mxu0 0.0
    %171 = vmatpush1.msra.mxu0 0.0
    %172 = vmatprep.subr.mxu0 0.0
    %173 = vmatpush1.msra.mxu0 0.0
    %174 = vmatprep.subr.mxu0 0.0
    %175 = vmatpush1.msra.mxu0 0.0
    %176 = vmatprep.subr.mxu0 0.0
    %177 = vmatpush1.msra.mxu0 0.0
    %178 = vmatprep.subr.mxu0 0.0
    %179 = vmatpush1.msra.mxu0 0.0
    %180 = vmatprep.subr.mxu0 0.0
    %181 = vmatpush1.msra.mxu0 0.0
    %182 = vmatprep.subr.mxu0 0.0
    %183 = vmatpush1.msra.mxu0 0.0
    %184 = vmatprep.mubr.f32.mxu0 0.0
    %185 = vmatmul.mubr.f32.gmra.mrb[0].mxu0 %v112
    %v186 = vpop.f32.mrb[0].mxu0
    %v187 = vadd.f32 0.0, %v186
    %v188 = vpop.f32.mrb[0].mxu0
    %189 = vmatprep.mubr.f32.mxu0 0.0
    %190 = vmatmul.mubr.f32.gmra.mrb[0].mxu0 %v113
    %v191 = vpop.f32.mrb[0].mxu0
    %v192 = vadd.f32 0.0, %v191
    %v193 = vpop.f32.mrb[0].mxu0
    %194 = vmatprep.mubr.f32.mxu0 0.0
    %195 = vmatmul.mubr.f32.gmra.mrb[0].mxu0 %v114
    %v196 = vpop.f32.mrb[0].mxu0
    %v197 = vadd.f32 0.0, %v196
    %v198 = vpop.f32.mrb[0].mxu0
    %199 = vmatprep.mubr.f32.mxu0 0.0
    %200 = vmatmul.mubr.f32.gmra.mrb[0].mxu0 %v115
    %v201 = vpop.f32.mrb[0].mxu0
    %v202 = vadd.f32 0.0, %v201
    %v203 = vpop.f32.mrb[0].mxu0
    %204 = vmatprep.mubr.f32.mxu0 0.0
    %205 = vmatmul.mubr.f32.gmra.mrb[0].mxu0 %v116
    %v206 = vpop.f32.mrb[0].mxu0
    %v207 = vadd.f32 0.0, %v206
    %v208 = vpop.f32.mrb[0].mxu0
    %209 = vmatprep.mubr.f32.mxu0 0.0
    %210 = vmatmul.mubr.f32.gmra.mrb[0].mxu0 %v117
    %v211 = vpop.f32.mrb[0].mxu0
    %v212 = vadd.f32 0.0, %v211
    %v213 = vpop.f32.mrb[0].mxu0
    %214 = vmatprep.mubr.f32.mxu0 0.0
    %215 = vmatmul.mubr.f32.gmra.mrb[0].mxu0 %v118
    %v216 = vpop.f32.mrb[0].mxu0
    %v217 = vadd.f32 0.0, %v216
    %v218 = vpop.f32.mrb[0].mxu0
    %219 = vmatprep.mubr.f32.mxu0 0.0
    %220 = vmatmul.mubr.f32.gmra.mrb[0].mxu0 %v119
    %v221 = vpop.f32.mrb[0].mxu0
    %v222 = vadd.f32 0.0, %v221
    %v223 = vpop.f32.mrb[0].mxu0
    %224 = vdwg.mxu0
    %s225 = scalar_lea.vmem %s0, 4
    %v226 = vld [vmem:[%s225] sm:$0xf]
    %v227 = vlaneseq
    %v228 = vshrl.u32 %v227, 7
    %v229 = vsub.s32 0, %v228
    %v230 = vrot.slane %v226, %v229
    %232 = vbcast.lane.b32.xlu0 %v230, 256
    %v233 = vpop.permute.xlu0 %232
    %s235 = sor.u32 256, 8
    %236 = vbcast.lane.b32.xlu0 %v230, %s235
    %v237 = vpop.permute.xlu0 %236
    %v238 = vlaneseq
    %v239 = vshrl.u32 %v238, 7
    %v240 = vsub.s32 1, %v239
    %v241 = vrot.slane %v226, %v240
    %243 = vbcast.lane.b32.xlu0 %v241, 256
    %v244 = vpop.permute.xlu0 %243
    %s246 = sor.u32 256, 8
    %247 = vbcast.lane.b32.xlu0 %v241, %s246
    %v248 = vpop.permute.xlu0 %247
    %v249 = vlaneseq
    %v250 = vshrl.u32 %v249, 7
    %v251 = vsub.s32 2, %v250
    %v252 = vrot.slane %v226, %v251
    %254 = vbcast.lane.b32.xlu0 %v252, 256
    %v255 = vpop.permute.xlu0 %254
    %s257 = sor.u32 256, 8
    %258 = vbcast.lane.b32.xlu0 %v252, %s257
    %v259 = vpop.permute.xlu0 %258
    %v260 = vlaneseq
    %v261 = vshrl.u32 %v260, 7
    %v262 = vsub.s32 3, %v261
    %v263 = vrot.slane %v226, %v262
    %265 = vbcast.lane.b32.xlu0 %v263, 256
    %v266 = vpop.permute.xlu0 %265
    %s268 = sor.u32 256, 8
    %269 = vbcast.lane.b32.xlu0 %v263, %s268
    %v270 = vpop.permute.xlu0 %269
    %vm271 = vcmp.eq.s32.totalorder %v51, %v233
    %vm272 = vcmp.eq.s32.totalorder %v51, %v237
    %vm273 = vcmp.eq.s32.totalorder %v51, %v244
    %vm274 = vcmp.eq.s32.totalorder %v51, %v248
    %vm275 = vcmp.eq.s32.totalorder %v51, %v255
    %vm276 = vcmp.eq.s32.totalorder %v51, %v259
    %vm277 = vcmp.eq.s32.totalorder %v51, %v266
    %vm278 = vcmp.eq.s32.totalorder %v51, %v270
    %v279 = vsel %vm271, 1, 0
    %v280 = vsel %vm272, 1, 0
    %v281 = vsel %vm273, 1, 0
    %v282 = vsel %vm274, 1, 0
    %v283 = vsel %vm275, 1, 0
    %v284 = vsel %vm276, 1, 0
    %v285 = vsel %vm277, 1, 0
    %v286 = vsel %vm278, 1, 0
    %v287 = vcvt.s32.f32 %v279
    %v288 = vcvt.s32.f32 %v280
    %v289 = vcvt.s32.f32 %v281
    %v290 = vcvt.s32.f32 %v282
    %v291 = vcvt.s32.f32 %v283
    %v292 = vcvt.s32.f32 %v284
    %v293 = vcvt.s32.f32 %v285
    %v294 = vcvt.s32.f32 %v286
    %295 = vmatprep.subr.mxu0 0.0
    %296 = vmatpush1.msra.mxu0 %v33
    %297 = vmatprep.subr.mxu0 0.0
    %298 = vmatpush1.msra.mxu0 %v34
    %299 = vmatprep.subr.mxu0 0.0
    %300 = vmatpush1.msra.mxu0 %v35
    %301 = vmatprep.subr.mxu0 0.0
    %302 = vmatpush1.msra.mxu0 %v36
    %303 = vmatprep.subr.mxu0 0.0
    %304 = vmatpush1.msra.mxu0 %v37
    %305 = vmatprep.subr.mxu0 0.0
    %306 = vmatpush1.msra.mxu0 %v38
    %307 = vmatprep.subr.mxu0 0.0
    %308 = vmatpush1.msra.mxu0 %v39
    %309 = vmatprep.subr.mxu0 0.0
    %310 = vmatpush1.msra.mxu0 %v40
    %311 = vmatprep.subr.mxu0 0.0
    %312 = vmatpush1.msra.mxu0 %v41
    %313 = vmatprep.subr.mxu0 0.0
    %314 = vmatpush1.msra.mxu0 %v42
    %315 = vmatprep.subr.mxu0 0.0
    %316 = vmatpush1.msra.mxu0 %v43
    %317 = vmatprep.subr.mxu0 0.0
    %318 = vmatpush1.msra.mxu0 %v44
    %319 = vmatprep.subr.mxu0 0.0
    %320 = vmatpush1.msra.mxu0 %v45
    %321 = vmatprep.subr.mxu0 0.0
    %322 = vmatpush1.msra.mxu0 %v46
    %323 = vmatprep.subr.mxu0 0.0
    %324 = vmatpush1.msra.mxu0 %v47
    %325 = vmatprep.subr.mxu0 0.0
    %326 = vmatpush1.msra.mxu0 %v48
    %327 = vmatprep.subr.mxu0 0.0
    %328 = vmatpush1.msra.mxu0 0.0
    %329 = vmatprep.subr.mxu0 0.0
    %330 = vmatpush1.msra.mxu0 0.0
    %331 = vmatprep.subr.mxu0 0.0
    %332 = vmatpush1.msra.mxu0 0.0
    %333 = vmatprep.subr.mxu0 0.0
    %334 = vmatpush1.msra.mxu0 0.0
    %335 = vmatprep.subr.mxu0 0.0
    %336 = vmatpush1.msra.mxu0 0.0
    %337 = vmatprep.subr.mxu0 0.0
    %338 = vmatpush1.msra.mxu0 0.0
    %339 = vmatprep.subr.mxu0 0.0
    %340 = vmatpush1.msra.mxu0 0.0
    %341 = vmatprep.subr.mxu0 0.0
    %342 = vmatpush1.msra.mxu0 0.0
    %343 = vmatprep.subr.mxu0 0.0
    %344 = vmatpush1.msra.mxu0 0.0
    %345 = vmatprep.subr.mxu0 0.0
    %346 = vmatpush1.msra.mxu0 0.0
    %347 = vmatprep.subr.mxu0 0.0
    %348 = vmatpush1.msra.mxu0 0.0
    %349 = vmatprep.subr.mxu0 0.0
    %350 = vmatpush1.msra.mxu0 0.0
    %351 = vmatprep.subr.mxu0 0.0
    %352 = vmatpush1.msra.mxu0 0.0
    %353 = vmatprep.subr.mxu0 0.0
    %354 = vmatpush1.msra.mxu0 0.0
    %355 = vmatprep.subr.mxu0 0.0
    %356 = vmatpush1.msra.mxu0 0.0
    %357 = vmatprep.subr.mxu0 0.0
    %358 = vmatpush1.msra.mxu0 0.0
    %359 = vmatprep.mubr.f32.mxu0 0.0
    %360 = vmatmul.mubr.f32.gmra.mrb[0].mxu0 %v287
    %v361 = vpop.f32.mrb[0].mxu0
    %v362 = vadd.f32 0.0, %v361
    %v363 = vpop.f32.mrb[0].mxu0
    %364 = vmatprep.mubr.f32.mxu0 0.0
    %365 = vmatmul.mubr.f32.gmra.mrb[0].mxu0 %v288
    %v366 = vpop.f32.mrb[0].mxu0
    %v367 = vadd.f32 0.0, %v366
    %v368 = vpop.f32.mrb[0].mxu0
    %369 = vmatprep.mubr.f32.mxu0 0.0
    %370 = vmatmul.mubr.f32.gmra.mrb[0].mxu0 %v289
    %v371 = vpop.f32.mrb[0].mxu0
    %v372 = vadd.f32 0.0, %v371
    %v373 = vpop.f32.mrb[0].mxu0
    %374 = vmatprep.mubr.f32.mxu0 0.0
    %375 = vmatmul.mubr.f32.gmra.mrb[0].mxu0 %v290
    %v376 = vpop.f32.mrb[0].mxu0
    %v377 = vadd.f32 0.0, %v376
    %v378 = vpop.f32.mrb[0].mxu0
    %379 = vmatprep.mubr.f32.mxu0 0.0
    %380 = vmatmul.mubr.f32.gmra.mrb[0].mxu0 %v291
    %v381 = vpop.f32.mrb[0].mxu0
    %v382 = vadd.f32 0.0, %v381
    %v383 = vpop.f32.mrb[0].mxu0
    %384 = vmatprep.mubr.f32.mxu0 0.0
    %385 = vmatmul.mubr.f32.gmra.mrb[0].mxu0 %v292
    %v386 = vpop.f32.mrb[0].mxu0
    %v387 = vadd.f32 0.0, %v386
    %v388 = vpop.f32.mrb[0].mxu0
    %389 = vmatprep.mubr.f32.mxu0 0.0
    %390 = vmatmul.mubr.f32.gmra.mrb[0].mxu0 %v293
    %v391 = vpop.f32.mrb[0].mxu0
    %v392 = vadd.f32 0.0, %v391
    %v393 = vpop.f32.mrb[0].mxu0
    %394 = vmatprep.mubr.f32.mxu0 0.0
    %395 = vmatmul.mubr.f32.gmra.mrb[0].mxu0 %v294
    %v396 = vpop.f32.mrb[0].mxu0
    %v397 = vadd.f32 0.0, %v396
    %v398 = vpop.f32.mrb[0].mxu0
    %399 = vdwg.mxu0
    %s400 = scalar_lea.vmem %s0, 8
    %v401 = vld [vmem:[%s400] sm:$0xf]
    %v402 = vlaneseq
    %v403 = vshrl.u32 %v402, 7
    %v404 = vsub.s32 0, %v403
    %v405 = vrot.slane %v401, %v404
    %407 = vbcast.lane.b32.xlu0 %v405, 256
    %v408 = vpop.permute.xlu0 %407
    %s410 = sor.u32 256, 8
    %411 = vbcast.lane.b32.xlu0 %v405, %s410
    %v412 = vpop.permute.xlu0 %411
    %v413 = vlaneseq
    %v414 = vshrl.u32 %v413, 7
    %v415 = vsub.s32 1, %v414
    %v416 = vrot.slane %v401, %v415
    %418 = vbcast.lane.b32.xlu0 %v416, 256
    %v419 = vpop.permute.xlu0 %418
    %s421 = sor.u32 256, 8
    %422 = vbcast.lane.b32.xlu0 %v416, %s421
    %v423 = vpop.permute.xlu0 %422
    %v424 = vlaneseq
    %v425 = vshrl.u32 %v424, 7
    %v426 = vsub.s32 2, %v425
    %v427 = vrot.slane %v401, %v426
    %429 = vbcast.lane.b32.xlu0 %v427, 256
    %v430 = vpop.permute.xlu0 %429
    %s432 = sor.u32 256, 8
    %433 = vbcast.lane.b32.xlu0 %v427, %s432
    %v434 = vpop.permute.xlu0 %433
    %v435 = vlaneseq
    %v436 = vshrl.u32 %v435, 7
    %v437 = vsub.s32 3, %v436
    %v438 = vrot.slane %v401, %v437
    %440 = vbcast.lane.b32.xlu0 %v438, 256
    %v441 = vpop.permute.xlu0 %440
    %s443 = sor.u32 256, 8
    %444 = vbcast.lane.b32.xlu0 %v438, %s443
    %v445 = vpop.permute.xlu0 %444
    %vm446 = vcmp.eq.s32.totalorder %v51, %v408
    %vm447 = vcmp.eq.s32.totalorder %v51, %v412
    %vm448 = vcmp.eq.s32.totalorder %v51, %v419
    %vm449 = vcmp.eq.s32.totalorder %v51, %v423
    %vm450 = vcmp.eq.s32.totalorder %v51, %v430
    %vm451 = vcmp.eq.s32.totalorder %v51, %v434
    %vm452 = vcmp.eq.s32.totalorder %v51, %v441
    %vm453 = vcmp.eq.s32.totalorder %v51, %v445
    %v454 = vsel %vm446, 1, 0
    %v455 = vsel %vm447, 1, 0
    %v456 = vsel %vm448, 1, 0
    %v457 = vsel %vm449, 1, 0
    %v458 = vsel %vm450, 1, 0
    %v459 = vsel %vm451, 1, 0
    %v460 = vsel %vm452, 1, 0
    %v461 = vsel %vm453, 1, 0
    %v462 = vcvt.s32.f32 %v454
    %v463 = vcvt.s32.f32 %v455
    %v464 = vcvt.s32.f32 %v456
    %v465 = vcvt.s32.f32 %v457
    %v466 = vcvt.s32.f32 %v458
    %v467 = vcvt.s32.f32 %v459
    %v468 = vcvt.s32.f32 %v460
    %v469 = vcvt.s32.f32 %v461
    %470 = vmatprep.subr.mxu0 0.0
    %471 = vmatpush1.msra.mxu0 %v33
    %472 = vmatprep.subr.mxu0 0.0
    %473 = vmatpush1.msra.mxu0 %v34
    %474 = vmatprep.subr.mxu0 0.0
    %475 = vmatpush1.msra.mxu0 %v35
    %476 = vmatprep.subr.mxu0 0.0
    %477 = vmatpush1.msra.mxu0 %v36
    %478 = vmatprep.subr.mxu0 0.0
    %479 = vmatpush1.msra.mxu0 %v37
    %480 = vmatprep.subr.mxu0 0.0
    %481 = vmatpush1.msra.mxu0 %v38
    %482 = vmatprep.subr.mxu0 0.0
    %483 = vmatpush1.msra.mxu0 %v39
    %484 = vmatprep.subr.mxu0 0.0
    %485 = vmatpush1.msra.mxu0 %v40
    %486 = vmatprep.subr.mxu0 0.0
    %487 = vmatpush1.msra.mxu0 %v41
    %488 = vmatprep.subr.mxu0 0.0
    %489 = vmatpush1.msra.mxu0 %v42
    %490 = vmatprep.subr.mxu0 0.0
    %491 = vmatpush1.msra.mxu0 %v43
    %492 = vmatprep.subr.mxu0 0.0
    %493 = vmatpush1.msra.mxu0 %v44
    %494 = vmatprep.subr.mxu0 0.0
    %495 = vmatpush1.msra.mxu0 %v45
    %496 = vmatprep.subr.mxu0 0.0
    %497 = vmatpush1.msra.mxu0 %v46
    %498 = vmatprep.subr.mxu0 0.0
    %499 = vmatpush1.msra.mxu0 %v47
    %500 = vmatprep.subr.mxu0 0.0
    %501 = vmatpush1.msra.mxu0 %v48
    %502 = vmatprep.subr.mxu0 0.0
    %503 = vmatpush1.msra.mxu0 0.0
    %504 = vmatprep.subr.mxu0 0.0
    %505 = vmatpush1.msra.mxu0 0.0
    %506 = vmatprep.subr.mxu0 0.0
    %507 = vmatpush1.msra.mxu0 0.0
    %508 = vmatprep.subr.mxu0 0.0
    %509 = vmatpush1.msra.mxu0 0.0
    %510 = vmatprep.subr.mxu0 0.0
    %511 = vmatpush1.msra.mxu0 0.0
    %512 = vmatprep.subr.mxu0 0.0
    %513 = vmatpush1.msra.mxu0 0.0
    %514 = vmatprep.subr.mxu0 0.0
    %515 = vmatpush1.msra.mxu0 0.0
    %516 = vmatprep.subr.mxu0 0.0
    %517 = vmatpush1.msra.mxu0 0.0
    %518 = vmatprep.subr.mxu0 0.0
    %519 = vmatpush1.msra.mxu0 0.0
    %520 = vmatprep.subr.mxu0 0.0
    %521 = vmatpush1.msra.mxu0 0.0
    %522 = vmatprep.subr.mxu0 0.0
    %523 = vmatpush1.msra.mxu0 0.0
    %524 = vmatprep.subr.mxu0 0.0
    %525 = vmatpush1.msra.mxu0 0.0
    %526 = vmatprep.subr.mxu0 0.0
    %527 = vmatpush1.msra.mxu0 0.0
    %528 = vmatprep.subr.mxu0 0.0
    %529 = vmatpush1.msra.mxu0 0.0
    %530 = vmatprep.subr.mxu0 0.0
    %531 = vmatpush1.msra.mxu0 0.0
    %532 = vmatprep.subr.mxu0 0.0
    %533 = vmatpush1.msra.mxu0 0.0
    %534 = vmatprep.mubr.f32.mxu0 0.0
    %535 = vmatmul.mubr.f32.gmra.mrb[0].mxu0 %v462
    %v536 = vpop.f32.mrb[0].mxu0
    %v537 = vadd.f32 0.0, %v536
    %v538 = vpop.f32.mrb[0].mxu0
    %539 = vmatprep.mubr.f32.mxu0 0.0
    %540 = vmatmul.mubr.f32.gmra.mrb[0].mxu0 %v463
    %v541 = vpop.f32.mrb[0].mxu0
    %v542 = vadd.f32 0.0, %v541
    %v543 = vpop.f32.mrb[0].mxu0
    %544 = vmatprep.mubr.f32.mxu0 0.0
    %545 = vmatmul.mubr.f32.gmra.mrb[0].mxu0 %v464
    %v546 = vpop.f32.mrb[0].mxu0
    %v547 = vadd.f32 0.0, %v546
    %v548 = vpop.f32.mrb[0].mxu0
    %549 = vmatprep.mubr.f32.mxu0 0.0
    %550 = vmatmul.mubr.f32.gmra.mrb[0].mxu0 %v465
    %v551 = vpop.f32.mrb[0].mxu0
    %v552 = vadd.f32 0.0, %v551
    %v553 = vpop.f32.mrb[0].mxu0
    %554 = vmatprep.mubr.f32.mxu0 0.0
    %555 = vmatmul.mubr.f32.gmra.mrb[0].mxu0 %v466
    %v556 = vpop.f32.mrb[0].mxu0
    %v557 = vadd.f32 0.0, %v556
    %v558 = vpop.f32.mrb[0].mxu0
    %559 = vmatprep.mubr.f32.mxu0 0.0
    %560 = vmatmul.mubr.f32.gmra.mrb[0].mxu0 %v467
    %v561 = vpop.f32.mrb[0].mxu0
    %v562 = vadd.f32 0.0, %v561
    %v563 = vpop.f32.mrb[0].mxu0
    %564 = vmatprep.mubr.f32.mxu0 0.0
    %565 = vmatmul.mubr.f32.gmra.mrb[0].mxu0 %v468
    %v566 = vpop.f32.mrb[0].mxu0
    %v567 = vadd.f32 0.0, %v566
    %v568 = vpop.f32.mrb[0].mxu0
    %569 = vmatprep.mubr.f32.mxu0 0.0
    %570 = vmatmul.mubr.f32.gmra.mrb[0].mxu0 %v469
    %v571 = vpop.f32.mrb[0].mxu0
    %v572 = vadd.f32 0.0, %v571
    %v573 = vpop.f32.mrb[0].mxu0
    %574 = vdwg.mxu0
    %s575 = scalar_lea.vmem %s0, 12
    %v576 = vld [vmem:[%s575] sm:$0xf]
    %v577 = vlaneseq
    %v578 = vshrl.u32 %v577, 7
    %v579 = vsub.s32 0, %v578
    %v580 = vrot.slane %v576, %v579
    %582 = vbcast.lane.b32.xlu0 %v580, 256
    %v583 = vpop.permute.xlu0 %582
    %s585 = sor.u32 256, 8
    %586 = vbcast.lane.b32.xlu0 %v580, %s585
    %v587 = vpop.permute.xlu0 %586
    %v588 = vlaneseq
    %v589 = vshrl.u32 %v588, 7
    %v590 = vsub.s32 1, %v589
    %v591 = vrot.slane %v576, %v590
    %593 = vbcast.lane.b32.xlu0 %v591, 256
    %v594 = vpop.permute.xlu0 %593
    %s596 = sor.u32 256, 8
    %597 = vbcast.lane.b32.xlu0 %v591, %s596
    %v598 = vpop.permute.xlu0 %597
    %v599 = vlaneseq
    %v600 = vshrl.u32 %v599, 7
    %v601 = vsub.s32 2, %v600
    %v602 = vrot.slane %v576, %v601
    %604 = vbcast.lane.b32.xlu0 %v602, 256
    %v605 = vpop.permute.xlu0 %604
    %s607 = sor.u32 256, 8
    %608 = vbcast.lane.b32.xlu0 %v602, %s607
    %v609 = vpop.permute.xlu0 %608
    %v610 = vlaneseq
    %v611 = vshrl.u32 %v610, 7
    %v612 = vsub.s32 3, %v611
    %v613 = vrot.slane %v576, %v612
    %615 = vbcast.lane.b32.xlu0 %v613, 256
    %v616 = vpop.permute.xlu0 %615
    %s618 = sor.u32 256, 8
    %619 = vbcast.lane.b32.xlu0 %v613, %s618
    %v620 = vpop.permute.xlu0 %619
    %vm621 = vcmp.eq.s32.totalorder %v51, %v583
    %vm622 = vcmp.eq.s32.totalorder %v51, %v587
    %vm623 = vcmp.eq.s32.totalorder %v51, %v594
    %vm624 = vcmp.eq.s32.totalorder %v51, %v598
    %vm625 = vcmp.eq.s32.totalorder %v51, %v605
    %vm626 = vcmp.eq.s32.totalorder %v51, %v609
    %vm627 = vcmp.eq.s32.totalorder %v51, %v616
    %vm628 = vcmp.eq.s32.totalorder %v51, %v620
    %v629 = vsel %vm621, 1, 0
    %v630 = vsel %vm622, 1, 0
    %v631 = vsel %vm623, 1, 0
    %v632 = vsel %vm624, 1, 0
    %v633 = vsel %vm625, 1, 0
    %v634 = vsel %vm626, 1, 0
    %v635 = vsel %vm627, 1, 0
    %v636 = vsel %vm628, 1, 0
    %v637 = vcvt.s32.f32 %v629
    %v638 = vcvt.s32.f32 %v630
    %v639 = vcvt.s32.f32 %v631
    %v640 = vcvt.s32.f32 %v632
    %v641 = vcvt.s32.f32 %v633
    %v642 = vcvt.s32.f32 %v634
    %v643 = vcvt.s32.f32 %v635
    %v644 = vcvt.s32.f32 %v636
    %645 = vmatprep.subr.mxu0 0.0
    %646 = vmatpush1.msra.mxu0 %v33
    %647 = vmatprep.subr.mxu0 0.0
    %648 = vmatpush1.msra.mxu0 %v34
    %649 = vmatprep.subr.mxu0 0.0
    %650 = vmatpush1.msra.mxu0 %v35
    %651 = vmatprep.subr.mxu0 0.0
    %652 = vmatpush1.msra.mxu0 %v36
    %653 = vmatprep.subr.mxu0 0.0
    %654 = vmatpush1.msra.mxu0 %v37
    %655 = vmatprep.subr.mxu0 0.0
    %656 = vmatpush1.msra.mxu0 %v38
    %657 = vmatprep.subr.mxu0 0.0
    %658 = vmatpush1.msra.mxu0 %v39
    %659 = vmatprep.subr.mxu0 0.0
    %660 = vmatpush1.msra.mxu0 %v40
    %661 = vmatprep.subr.mxu0 0.0
    %662 = vmatpush1.msra.mxu0 %v41
    %663 = vmatprep.subr.mxu0 0.0
    %664 = vmatpush1.msra.mxu0 %v42
    %665 = vmatprep.subr.mxu0 0.0
    %666 = vmatpush1.msra.mxu0 %v43
    %667 = vmatprep.subr.mxu0 0.0
    %668 = vmatpush1.msra.mxu0 %v44
    %669 = vmatprep.subr.mxu0 0.0
    %670 = vmatpush1.msra.mxu0 %v45
    %671 = vmatprep.subr.mxu0 0.0
    %672 = vmatpush1.msra.mxu0 %v46
    %673 = vmatprep.subr.mxu0 0.0
    %674 = vmatpush1.msra.mxu0 %v47
    %675 = vmatprep.subr.mxu0 0.0
    %676 = vmatpush1.msra.mxu0 %v48
    %677 = vmatprep.subr.mxu0 0.0
    %678 = vmatpush1.msra.mxu0 0.0
    %679 = vmatprep.subr.mxu0 0.0
    %680 = vmatpush1.msra.mxu0 0.0
    %681 = vmatprep.subr.mxu0 0.0
    %682 = vmatpush1.msra.mxu0 0.0
    %683 = vmatprep.subr.mxu0 0.0
    %684 = vmatpush1.msra.mxu0 0.0
    %685 = vmatprep.subr.mxu0 0.0
    %686 = vmatpush1.msra.mxu0 0.0
    %687 = vmatprep.subr.mxu0 0.0
    %688 = vmatpush1.msra.mxu0 0.0
    %689 = vmatprep.subr.mxu0 0.0
    %690 = vmatpush1.msra.mxu0 0.0
    %691 = vmatprep.subr.mxu0 0.0
    %692 = vmatpush1.msra.mxu0 0.0
    %693 = vmatprep.subr.mxu0 0.0
    %694 = vmatpush1.msra.mxu0 0.0
    %695 = vmatprep.subr.mxu0 0.0
    %696 = vmatpush1.msra.mxu0 0.0
    %697 = vmatprep.subr.mxu0 0.0
    %698 = vmatpush1.msra.mxu0 0.0
    %699 = vmatprep.subr.mxu0 0.0
    %700 = vmatpush1.msra.mxu0 0.0
    %701 = vmatprep.subr.mxu0 0.0
    %702 = vmatpush1.msra.mxu0 0.0
    %703 = vmatprep.subr.mxu0 0.0
    %704 = vmatpush1.msra.mxu0 0.0
    %705 = vmatprep.subr.mxu0 0.0
    %706 = vmatpush1.msra.mxu0 0.0
    %707 = vmatprep.subr.mxu0 0.0
    %708 = vmatpush1.msra.mxu0 0.0
    %709 = vmatprep.mubr.f32.mxu0 0.0
    %710 = vmatmul.mubr.f32.gmra.mrb[0].mxu0 %v637
    %v711 = vpop.f32.mrb[0].mxu0
    %v712 = vadd.f32 0.0, %v711
    %v713 = vpop.f32.mrb[0].mxu0
    %714 = vmatprep.mubr.f32.mxu0 0.0
    %715 = vmatmul.mubr.f32.gmra.mrb[0].mxu0 %v638
    %v716 = vpop.f32.mrb[0].mxu0
    %v717 = vadd.f32 0.0, %v716
    %v718 = vpop.f32.mrb[0].mxu0
    %719 = vmatprep.mubr.f32.mxu0 0.0
    %720 = vmatmul.mubr.f32.gmra.mrb[0].mxu0 %v639
    %v721 = vpop.f32.mrb[0].mxu0
    %v722 = vadd.f32 0.0, %v721
    %v723 = vpop.f32.mrb[0].mxu0
    %724 = vmatprep.mubr.f32.mxu0 0.0
    %725 = vmatmul.mubr.f32.gmra.mrb[0].mxu0 %v640
    %v726 = vpop.f32.mrb[0].mxu0
    %v727 = vadd.f32 0.0, %v726
    %v728 = vpop.f32.mrb[0].mxu0
    %729 = vmatprep.mubr.f32.mxu0 0.0
    %730 = vmatmul.mubr.f32.gmra.mrb[0].mxu0 %v641
    %v731 = vpop.f32.mrb[0].mxu0
    %v732 = vadd.f32 0.0, %v731
    %v733 = vpop.f32.mrb[0].mxu0
    %734 = vmatprep.mubr.f32.mxu0 0.0
    %735 = vmatmul.mubr.f32.gmra.mrb[0].mxu0 %v642
    %v736 = vpop.f32.mrb[0].mxu0
    %v737 = vadd.f32 0.0, %v736
    %v738 = vpop.f32.mrb[0].mxu0
    %739 = vmatprep.mubr.f32.mxu0 0.0
    %740 = vmatmul.mubr.f32.gmra.mrb[0].mxu0 %v643
    %v741 = vpop.f32.mrb[0].mxu0
    %v742 = vadd.f32 0.0, %v741
    %v743 = vpop.f32.mrb[0].mxu0
    %744 = vmatprep.mubr.f32.mxu0 0.0
    %745 = vmatmul.mubr.f32.gmra.mrb[0].mxu0 %v644
    %v746 = vpop.f32.mrb[0].mxu0
    %v747 = vadd.f32 0.0, %v746
    %v748 = vpop.f32.mrb[0].mxu0
    %749 = vdwg.mxu0
    %s750 = scalar_lea.vmem %s0, 16
    %v751 = vld [vmem:[%s750] sm:$0xf]
    %v752 = vlaneseq
    %v753 = vshrl.u32 %v752, 7
    %v754 = vsub.s32 0, %v753
    %v755 = vrot.slane %v751, %v754
    %757 = vbcast.lane.b32.xlu0 %v755, 256
    %v758 = vpop.permute.xlu0 %757
    %s760 = sor.u32 256, 8
    %761 = vbcast.lane.b32.xlu0 %v755, %s760
    %v762 = vpop.permute.xlu0 %761
    %v763 = vlaneseq
    %v764 = vshrl.u32 %v763, 7
    %v765 = vsub.s32 1, %v764
    %v766 = vrot.slane %v751, %v765
    %768 = vbcast.lane.b32.xlu0 %v766, 256
    %v769 = vpop.permute.xlu0 %768
    %s771 = sor.u32 256, 8
    %772 = vbcast.lane.b32.xlu0 %v766, %s771
    %v773 = vpop.permute.xlu0 %772
    %v774 = vlaneseq
    %v775 = vshrl.u32 %v774, 7
    %v776 = vsub.s32 2, %v775
    %v777 = vrot.slane %v751, %v776
    %779 = vbcast.lane.b32.xlu0 %v777, 256
    %v780 = vpop.permute.xlu0 %779
    %s782 = sor.u32 256, 8
    %783 = vbcast.lane.b32.xlu0 %v777, %s782
    %v784 = vpop.permute.xlu0 %783
    %v785 = vlaneseq
    %v786 = vshrl.u32 %v785, 7
    %v787 = vsub.s32 3, %v786
    %v788 = vrot.slane %v751, %v787
    %790 = vbcast.lane.b32.xlu0 %v788, 256
    %v791 = vpop.permute.xlu0 %790
    %s793 = sor.u32 256, 8
    %794 = vbcast.lane.b32.xlu0 %v788, %s793
    %v795 = vpop.permute.xlu0 %794
    %vm796 = vcmp.eq.s32.totalorder %v51, %v758
    %vm797 = vcmp.eq.s32.totalorder %v51, %v762
    %vm798 = vcmp.eq.s32.totalorder %v51, %v769
    %vm799 = vcmp.eq.s32.totalorder %v51, %v773
    %vm800 = vcmp.eq.s32.totalorder %v51, %v780
    %vm801 = vcmp.eq.s32.totalorder %v51, %v784
    %vm802 = vcmp.eq.s32.totalorder %v51, %v791
    %vm803 = vcmp.eq.s32.totalorder %v51, %v795
    %v804 = vsel %vm796, 1, 0
    %v805 = vsel %vm797, 1, 0
    %v806 = vsel %vm798, 1, 0
    %v807 = vsel %vm799, 1, 0
    %v808 = vsel %vm800, 1, 0
    %v809 = vsel %vm801, 1, 0
    %v810 = vsel %vm802, 1, 0
    %v811 = vsel %vm803, 1, 0
    %v812 = vcvt.s32.f32 %v804
    %v813 = vcvt.s32.f32 %v805
    %v814 = vcvt.s32.f32 %v806
    %v815 = vcvt.s32.f32 %v807
    %v816 = vcvt.s32.f32 %v808
    %v817 = vcvt.s32.f32 %v809
    %v818 = vcvt.s32.f32 %v810
    %v819 = vcvt.s32.f32 %v811
    %820 = vmatprep.subr.mxu0 0.0
    %821 = vmatpush1.msra.mxu0 %v33
    %822 = vmatprep.subr.mxu0 0.0
    %823 = vmatpush1.msra.mxu0 %v34
    %824 = vmatprep.subr.mxu0 0.0
    %825 = vmatpush1.msra.mxu0 %v35
    %826 = vmatprep.subr.mxu0 0.0
    %827 = vmatpush1.msra.mxu0 %v36
    %828 = vmatprep.subr.mxu0 0.0
    %829 = vmatpush1.msra.mxu0 %v37
    %830 = vmatprep.subr.mxu0 0.0
    %831 = vmatpush1.msra.mxu0 %v38
    %832 = vmatprep.subr.mxu0 0.0
    %833 = vmatpush1.msra.mxu0 %v39
    %834 = vmatprep.subr.mxu0 0.0
    %835 = vmatpush1.msra.mxu0 %v40
    %836 = vmatprep.subr.mxu0 0.0
    %837 = vmatpush1.msra.mxu0 %v41
    %838 = vmatprep.subr.mxu0 0.0
    %839 = vmatpush1.msra.mxu0 %v42
    %840 = vmatprep.subr.mxu0 0.0
    %841 = vmatpush1.msra.mxu0 %v43
    %842 = vmatprep.subr.mxu0 0.0
    %843 = vmatpush1.msra.mxu0 %v44
    %844 = vmatprep.subr.mxu0 0.0
    %845 = vmatpush1.msra.mxu0 %v45
    %846 = vmatprep.subr.mxu0 0.0
    %847 = vmatpush1.msra.mxu0 %v46
    %848 = vmatprep.subr.mxu0 0.0
    %849 = vmatpush1.msra.mxu0 %v47
    %850 = vmatprep.subr.mxu0 0.0
    %851 = vmatpush1.msra.mxu0 %v48
    %852 = vmatprep.subr.mxu0 0.0
    %853 = vmatpush1.msra.mxu0 0.0
    %854 = vmatprep.subr.mxu0 0.0
    %855 = vmatpush1.msra.mxu0 0.0
    %856 = vmatprep.subr.mxu0 0.0
    %857 = vmatpush1.msra.mxu0 0.0
    %858 = vmatprep.subr.mxu0 0.0
    %859 = vmatpush1.msra.mxu0 0.0
    %860 = vmatprep.subr.mxu0 0.0
    %861 = vmatpush1.msra.mxu0 0.0
    %862 = vmatprep.subr.mxu0 0.0
    %863 = vmatpush1.msra.mxu0 0.0
    %864 = vmatprep.subr.mxu0 0.0
    %865 = vmatpush1.msra.mxu0 0.0
    %866 = vmatprep.subr.mxu0 0.0
    %867 = vmatpush1.msra.mxu0 0.0
    %868 = vmatprep.subr.mxu0 0.0
    %869 = vmatpush1.msra.mxu0 0.0
    %870 = vmatprep.subr.mxu0 0.0
    %871 = vmatpush1.msra.mxu0 0.0
    %872 = vmatprep.subr.mxu0 0.0
    %873 = vmatpush1.msra.mxu0 0.0
    %874 = vmatprep.subr.mxu0 0.0
    %875 = vmatpush1.msra.mxu0 0.0
    %876 = vmatprep.subr.mxu0 0.0
    %877 = vmatpush1.msra.mxu0 0.0
    %878 = vmatprep.subr.mxu0 0.0
    %879 = vmatpush1.msra.mxu0 0.0
    %880 = vmatprep.subr.mxu0 0.0
    %881 = vmatpush1.msra.mxu0 0.0
    %882 = vmatprep.subr.mxu0 0.0
    %883 = vmatpush1.msra.mxu0 0.0
    %884 = vmatprep.mubr.f32.mxu0 0.0
    %885 = vmatmul.mubr.f32.gmra.mrb[0].mxu0 %v812
    %v886 = vpop.f32.mrb[0].mxu0
    %v887 = vadd.f32 0.0, %v886
    %v888 = vpop.f32.mrb[0].mxu0
    %889 = vmatprep.mubr.f32.mxu0 0.0
    %890 = vmatmul.mubr.f32.gmra.mrb[0].mxu0 %v813
    %v891 = vpop.f32.mrb[0].mxu0
    %v892 = vadd.f32 0.0, %v891
    %v893 = vpop.f32.mrb[0].mxu0
    %894 = vmatprep.mubr.f32.mxu0 0.0
    %895 = vmatmul.mubr.f32.gmra.mrb[0].mxu0 %v814
    %v896 = vpop.f32.mrb[0].mxu0
    %v897 = vadd.f32 0.0, %v896
    %v898 = vpop.f32.mrb[0].mxu0
    %899 = vmatprep.mubr.f32.mxu0 0.0
    %900 = vmatmul.mubr.f32.gmra.mrb[0].mxu0 %v815
    %v901 = vpop.f32.mrb[0].mxu0
    %v902 = vadd.f32 0.0, %v901
    %v903 = vpop.f32.mrb[0].mxu0
    %904 = vmatprep.mubr.f32.mxu0 0.0
    %905 = vmatmul.mubr.f32.gmra.mrb[0].mxu0 %v816
    %v906 = vpop.f32.mrb[0].mxu0
    %v907 = vadd.f32 0.0, %v906
    %v908 = vpop.f32.mrb[0].mxu0
    %909 = vmatprep.mubr.f32.mxu0 0.0
    %910 = vmatmul.mubr.f32.gmra.mrb[0].mxu0 %v817
    %v911 = vpop.f32.mrb[0].mxu0
    %v912 = vadd.f32 0.0, %v911
    %v913 = vpop.f32.mrb[0].mxu0
    %914 = vmatprep.mubr.f32.mxu0 0.0
    %915 = vmatmul.mubr.f32.gmra.mrb[0].mxu0 %v818
    %v916 = vpop.f32.mrb[0].mxu0
    %v917 = vadd.f32 0.0, %v916
    %v918 = vpop.f32.mrb[0].mxu0
    %919 = vmatprep.mubr.f32.mxu0 0.0
    %920 = vmatmul.mubr.f32.gmra.mrb[0].mxu0 %v819
    %v921 = vpop.f32.mrb[0].mxu0
    %v922 = vadd.f32 0.0, %v921
    %v923 = vpop.f32.mrb[0].mxu0
    %924 = vdwg.mxu0
    %933 = vrot.lane.b32.xlu0 %v362, 32
    %v934 = vpop.permute.xlu0 %933
    %935 = vrot.lane.b32.xlu0 %v367, 32
    %v936 = vpop.permute.xlu0 %935
    %937 = vrot.lane.b32.xlu0 %v372, 32
    %v938 = vpop.permute.xlu0 %937
    %939 = vrot.lane.b32.xlu0 %v377, 32
    %v940 = vpop.permute.xlu0 %939
    %941 = vrot.lane.b32.xlu0 %v382, 32
    %v942 = vpop.permute.xlu0 %941
    %943 = vrot.lane.b32.xlu0 %v387, 32
    %v944 = vpop.permute.xlu0 %943
    %945 = vrot.lane.b32.xlu0 %v392, 32
    %v946 = vpop.permute.xlu0 %945
    %947 = vrot.lane.b32.xlu0 %v397, 32
    %v948 = vpop.permute.xlu0 %947
    %965 = vrot.lane.b32.xlu0 %v537, 64
    %v966 = vpop.permute.xlu0 %965
    %967 = vrot.lane.b32.xlu0 %v542, 64
    %v968 = vpop.permute.xlu0 %967
    %969 = vrot.lane.b32.xlu0 %v547, 64
    %v970 = vpop.permute.xlu0 %969
    %971 = vrot.lane.b32.xlu0 %v552, 64
    %v972 = vpop.permute.xlu0 %971
    %973 = vrot.lane.b32.xlu0 %v557, 64
    %v974 = vpop.permute.xlu0 %973
    %975 = vrot.lane.b32.xlu0 %v562, 64
    %v976 = vpop.permute.xlu0 %975
    %977 = vrot.lane.b32.xlu0 %v567, 64
    %v978 = vpop.permute.xlu0 %977
    %979 = vrot.lane.b32.xlu0 %v572, 64
    %v980 = vpop.permute.xlu0 %979
    %997 = vrot.lane.b32.xlu0 %v712, 96
    %v998 = vpop.permute.xlu0 %997
    %999 = vrot.lane.b32.xlu0 %v717, 96
    %v1000 = vpop.permute.xlu0 %999
    %1001 = vrot.lane.b32.xlu0 %v722, 96
    %v1002 = vpop.permute.xlu0 %1001
    %1003 = vrot.lane.b32.xlu0 %v727, 96
    %v1004 = vpop.permute.xlu0 %1003
    %1005 = vrot.lane.b32.xlu0 %v732, 96
    %v1006 = vpop.permute.xlu0 %1005
    %1007 = vrot.lane.b32.xlu0 %v737, 96
    %v1008 = vpop.permute.xlu0 %1007
    %1009 = vrot.lane.b32.xlu0 %v742, 96
    %v1010 = vpop.permute.xlu0 %1009
    %1011 = vrot.lane.b32.xlu0 %v747, 96
    %v1012 = vpop.permute.xlu0 %1011
    %vm1021 = vcmask 261120
    %v1022 = vsel %vm1021, %v187, %v934
    %v1023 = vsel %vm1021, %v192, %v936
    %v1024 = vsel %vm1021, %v197, %v938
    %v1025 = vsel %vm1021, %v202, %v940
    %v1026 = vsel %vm1021, %v207, %v942
    %v1027 = vsel %vm1021, %v212, %v944
    %v1028 = vsel %vm1021, %v217, %v946
    %v1029 = vsel %vm1021, %v222, %v948
    %vm1030 = vcmask 523264
    %v1031 = vsel %vm1030, %v1022, %v966
    %v1032 = vsel %vm1030, %v1023, %v968
    %v1033 = vsel %vm1030, %v1024, %v970
    %v1034 = vsel %vm1030, %v1025, %v972
    %v1035 = vsel %vm1030, %v1026, %v974
    %v1036 = vsel %vm1030, %v1027, %v976
    %v1037 = vsel %vm1030, %v1028, %v978
    %v1038 = vsel %vm1030, %v1029, %v980
    %vm1039 = vcmask 785408
    %v1040 = vsel %vm1039, %v1031, %v998
    %v1041 = vsel %vm1039, %v1032, %v1000
    %v1042 = vsel %vm1039, %v1033, %v1002
    %v1043 = vsel %vm1039, %v1034, %v1004
    %v1044 = vsel %vm1039, %v1035, %v1006
    %v1045 = vsel %vm1039, %v1036, %v1008
    %v1046 = vsel %vm1039, %v1037, %v1010
    %v1047 = vsel %vm1039, %v1038, %v1012
    %v1048 = vld [vmem:[%s2] sm:$0xff]
    %v1049 = vld [vmem:[%s2 + $0x8] sm:$0xff]
    %v1050 = vld [vmem:[%s2 + $0x10] sm:$0xff]
    %v1051 = vld [vmem:[%s2 + $0x18] sm:$0xff]
    %v1052 = vld [vmem:[%s2 + $0x20] sm:$0xff]
    %v1053 = vld [vmem:[%s2 + $0x28] sm:$0xff]
    %v1054 = vld [vmem:[%s2 + $0x30] sm:$0xff]
    %v1055 = vld [vmem:[%s2 + $0x38] sm:$0xff]
    %v1056 = vld [vmem:[%s2 + $0x40] sm:$0xff]
    %v1057 = vld [vmem:[%s2 + $0x48] sm:$0xff]
    %v1058 = vld [vmem:[%s2 + $0x50] sm:$0xff]
    %v1059 = vld [vmem:[%s2 + $0x58] sm:$0xff]
    %v1060 = vld [vmem:[%s2 + $0x60] sm:$0xff]
    %v1061 = vld [vmem:[%s2 + $0x68] sm:$0xff]
    %v1062 = vld [vmem:[%s2 + $0x70] sm:$0xff]
    %v1063 = vld [vmem:[%s2 + $0x78] sm:$0xff]
    %v1064 = vld [vmem:[%s2 + $0x80] sm:$0xff]
    %v1065 = vld [vmem:[%s2 + $0x88] sm:$0xff]
    %v1066 = vld [vmem:[%s2 + $0x90] sm:$0xff]
    %v1067 = vld [vmem:[%s2 + $0x98] sm:$0xff]
    %v1068 = vld [vmem:[%s2 + $0xa0] sm:$0xff]
    %v1069 = vld [vmem:[%s2 + $0xa8] sm:$0xff]
    %v1070 = vld [vmem:[%s2 + $0xb0] sm:$0xff]
    %v1071 = vld [vmem:[%s2 + $0xb8] sm:$0xff]
    %v1072 = vld [vmem:[%s2 + $0xc0] sm:$0xff]
    %v1073 = vld [vmem:[%s2 + $0xc8] sm:$0xff]
    %v1074 = vld [vmem:[%s2 + $0xd0] sm:$0xff]
    %v1075 = vld [vmem:[%s2 + $0xd8] sm:$0xff]
    %v1076 = vld [vmem:[%s2 + $0xe0] sm:$0xff]
    %v1077 = vld [vmem:[%s2 + $0xe8] sm:$0xff]
    %v1078 = vld [vmem:[%s2 + $0xf0] sm:$0xff]
    %v1079 = vld [vmem:[%s2 + $0xf8] sm:$0xff]
    %v1080 = vld [vmem:[%s2 + $0x100] sm:$0xff]
    %v1081 = vld [vmem:[%s2 + $0x108] sm:$0xff]
    %v1082 = vld [vmem:[%s2 + $0x110] sm:$0xff]
    %v1083 = vld [vmem:[%s2 + $0x118] sm:$0xff]
    %v1084 = vld [vmem:[%s2 + $0x120] sm:$0xff]
    %v1085 = vld [vmem:[%s2 + $0x128] sm:$0xff]
    %v1086 = vld [vmem:[%s2 + $0x130] sm:$0xff]
    %v1087 = vld [vmem:[%s2 + $0x138] sm:$0xff]
    %v1088 = vld [vmem:[%s2 + $0x140] sm:$0xff]
    %v1089 = vld [vmem:[%s2 + $0x148] sm:$0xff]
    %v1090 = vld [vmem:[%s2 + $0x150] sm:$0xff]
    %v1091 = vld [vmem:[%s2 + $0x158] sm:$0xff]
    %v1092 = vld [vmem:[%s2 + $0x160] sm:$0xff]
    %v1093 = vld [vmem:[%s2 + $0x168] sm:$0xff]
    %v1094 = vld [vmem:[%s2 + $0x170] sm:$0xff]
    %v1095 = vld [vmem:[%s2 + $0x178] sm:$0xff]
    %v1096 = vld [vmem:[%s2 + $0x180] sm:$0xff]
    %v1097 = vld [vmem:[%s2 + $0x188] sm:$0xff]
    %v1098 = vld [vmem:[%s2 + $0x190] sm:$0xff]
    %v1099 = vld [vmem:[%s2 + $0x198] sm:$0xff]
    %v1100 = vld [vmem:[%s2 + $0x1a0] sm:$0xff]
    %v1101 = vld [vmem:[%s2 + $0x1a8] sm:$0xff]
    %v1102 = vld [vmem:[%s2 + $0x1b0] sm:$0xff]
    %v1103 = vld [vmem:[%s2 + $0x1b8] sm:$0xff]
    %v1104 = vld [vmem:[%s2 + $0x1c0] sm:$0xff]
    %v1105 = vld [vmem:[%s2 + $0x1c8] sm:$0xff]
    %v1106 = vld [vmem:[%s2 + $0x1d0] sm:$0xff]
    %v1107 = vld [vmem:[%s2 + $0x1d8] sm:$0xff]
    %v1108 = vld [vmem:[%s3] sm:$0x7]
    %v1110 = vlaneseq
    %v1111 = vshrl.u32 %v1110, 7
    %v1112 = vsub.s32 0, %v1111
    %v1113 = vrot.slane %v1108, %v1112
    %v1114 = vlaneseq
    %v1115 = vshrl.u32 %v1114, 7
    %v1116 = vsub.s32 1, %v1115
    %v1117 = vrot.slane %v1108, %v1116
    %v1118 = vlaneseq
    %v1119 = vshrl.u32 %v1118, 7
    %v1120 = vsub.s32 2, %v1119
    %v1121 = vrot.slane %v1108, %v1120
    %v1126 = vsel %vm1021, %v887, 0
    %v1129 = vsel %vm1021, %v892, 0
    %v1132 = vsel %vm1021, %v897, 0
    %v1135 = vsel %vm1021, %v902, 0
    %v1138 = vsel %vm1021, %v907, 0
    %v1141 = vsel %vm1021, %v912, 0
    %v1144 = vsel %vm1021, %v917, 0
    %v1147 = vsel %vm1021, %v922, 0
    %1149 = vmatprep.subr.mxu0 %v1049
    %1150 = vmatpush1.msra.mxu0 %v1048
    %1151 = vmatprep.subr.mxu0 %v1052
    %1152 = vmatpush1.msra.mxu0 %v1051
    %1153 = vmatprep.subr.mxu0 %v1055
    %1154 = vmatpush1.msra.mxu0 %v1054
    %1155 = vmatprep.subr.mxu0 %v1058
    %1156 = vmatpush1.msra.mxu0 %v1057
    %1157 = vmatprep.subr.mxu0 %v1061
    %1158 = vmatpush1.msra.mxu0 %v1060
    %1159 = vmatprep.subr.mxu0 %v1064
    %1160 = vmatpush1.msra.mxu0 %v1063
    %1161 = vmatprep.subr.mxu0 %v1067
    %1162 = vmatpush1.msra.mxu0 %v1066
    %1163 = vmatprep.subr.mxu0 %v1070
    %1164 = vmatpush1.msra.mxu0 %v1069
    %1165 = vmatprep.subr.mxu0 %v1073
    %1166 = vmatpush1.msra.mxu0 %v1072
    %1167 = vmatprep.subr.mxu0 %v1076
    %1168 = vmatpush1.msra.mxu0 %v1075
    %1169 = vmatprep.subr.mxu0 %v1079
    %1170 = vmatpush1.msra.mxu0 %v1078
    %1171 = vmatprep.subr.mxu0 %v1082
    %1172 = vmatpush1.msra.mxu0 %v1081
    %1173 = vmatprep.subr.mxu0 %v1085
    %1174 = vmatpush1.msra.mxu0 %v1084
    %1175 = vmatprep.subr.mxu0 %v1088
    %1176 = vmatpush1.msra.mxu0 %v1087
    %1177 = vmatprep.subr.mxu0 %v1091
    %1178 = vmatpush1.msra.mxu0 %v1090
    %1179 = vmatprep.subr.mxu0 %v1094
    %1180 = vmatpush1.msra.mxu0 %v1093
    %1181 = vmatprep.subr.mxu0 %v1097
    %1182 = vmatpush1.msra.mxu0 %v1096
    %1183 = vmatprep.subr.mxu0 %v1100
    %1184 = vmatpush1.msra.mxu0 %v1099
    %1185 = vmatprep.subr.mxu0 %v1103
    %1186 = vmatpush1.msra.mxu0 %v1102
    %1187 = vmatprep.subr.mxu0 %v1106
    %1188 = vmatpush1.msra.mxu0 %v1105
    %1189 = vmatprep.subr.mxu0 0.0
    %1190 = vmatpush1.msra.mxu0 0.0
    %1191 = vmatprep.subr.mxu0 0.0
    %1192 = vmatpush1.msra.mxu0 0.0
    %1193 = vmatprep.subr.mxu0 0.0
    %1194 = vmatpush1.msra.mxu0 0.0
    %1195 = vmatprep.subr.mxu0 0.0
    %1196 = vmatpush1.msra.mxu0 0.0
    %1197 = vmatprep.subr.mxu0 0.0
    %1198 = vmatpush1.msra.mxu0 0.0
    %1199 = vmatprep.subr.mxu0 0.0
    %1200 = vmatpush1.msra.mxu0 0.0
    %1201 = vmatprep.subr.mxu0 0.0
    %1202 = vmatpush1.msra.mxu0 0.0
    %1203 = vmatprep.subr.mxu0 0.0
    %1204 = vmatpush1.msra.mxu0 0.0
    %1205 = vmatprep.subr.mxu0 0.0
    %1206 = vmatpush1.msra.mxu0 0.0
    %1207 = vmatprep.subr.mxu0 0.0
    %1208 = vmatpush1.msra.mxu0 0.0
    %1209 = vmatprep.subr.mxu0 0.0
    %1210 = vmatpush1.msra.mxu0 0.0
    %1211 = vmatprep.subr.mxu0 0.0
    %1212 = vmatpush1.msra.mxu0 0.0
    %1213 = vmatprep.mubr.f32.mxu0 %v1126
    %1214 = vmatmul.mubr.f32.gmra.mrb[0].mxu0 %v1040
    %v1215 = vpop.f32.mrb[0].mxu0
    %v1216 = vadd.f32 %v1113, %v1215
    %v1217 = vpop.f32.mrb[0].mxu0
    %v1218 = vadd.f32 %v1117, %v1217
    %1219 = vmatprep.mubr.f32.mxu0 %v1129
    %1220 = vmatmul.mubr.f32.gmra.mrb[0].mxu0 %v1041
    %v1221 = vpop.f32.mrb[0].mxu0
    %v1222 = vadd.f32 %v1113, %v1221
    %v1223 = vpop.f32.mrb[0].mxu0
    %v1224 = vadd.f32 %v1117, %v1223
    %1225 = vmatprep.mubr.f32.mxu0 %v1132
    %1226 = vmatmul.mubr.f32.gmra.mrb[0].mxu0 %v1042
    %v1227 = vpop.f32.mrb[0].mxu0
    %v1228 = vadd.f32 %v1113, %v1227
    %v1229 = vpop.f32.mrb[0].mxu0
    %v1230 = vadd.f32 %v1117, %v1229
    %1231 = vmatprep.mubr.f32.mxu0 %v1135
    %1232 = vmatmul.mubr.f32.gmra.mrb[0].mxu0 %v1043
    %v1233 = vpop.f32.mrb[0].mxu0
    %v1234 = vadd.f32 %v1113, %v1233
    %v1235 = vpop.f32.mrb[0].mxu0
    %v1236 = vadd.f32 %v1117, %v1235
    %1237 = vmatprep.mubr.f32.mxu0 %v1138
    %1238 = vmatmul.mubr.f32.gmra.mrb[0].mxu0 %v1044
    %v1239 = vpop.f32.mrb[0].mxu0
    %v1240 = vadd.f32 %v1113, %v1239
    %v1241 = vpop.f32.mrb[0].mxu0
    %v1242 = vadd.f32 %v1117, %v1241
    %1243 = vmatprep.mubr.f32.mxu0 %v1141
    %1244 = vmatmul.mubr.f32.gmra.mrb[0].mxu0 %v1045
    %v1245 = vpop.f32.mrb[0].mxu0
    %v1246 = vadd.f32 %v1113, %v1245
    %v1247 = vpop.f32.mrb[0].mxu0
    %v1248 = vadd.f32 %v1117, %v1247
    %1249 = vmatprep.mubr.f32.mxu0 %v1144
    %1250 = vmatmul.mubr.f32.gmra.mrb[0].mxu0 %v1046
    %v1251 = vpop.f32.mrb[0].mxu0
    %v1252 = vadd.f32 %v1113, %v1251
    %v1253 = vpop.f32.mrb[0].mxu0
    %v1254 = vadd.f32 %v1117, %v1253
    %1255 = vmatprep.mubr.f32.mxu0 %v1147
    %1256 = vmatmul.mubr.f32.gmra.mrb[0].mxu0 %v1047
    %v1257 = vpop.f32.mrb[0].mxu0
    %v1258 = vadd.f32 %v1113, %v1257
    %v1259 = vpop.f32.mrb[0].mxu0
    %v1260 = vadd.f32 %v1117, %v1259
    %1261 = vdwg.mxu0
    %1262 = vmatprep.subr.mxu0 0.0
    %1263 = vmatpush1.msra.mxu0 %v1050
    %1264 = vmatprep.subr.mxu0 0.0
    %1265 = vmatpush1.msra.mxu0 %v1053
    %1266 = vmatprep.subr.mxu0 0.0
    %1267 = vmatpush1.msra.mxu0 %v1056
    %1268 = vmatprep.subr.mxu0 0.0
    %1269 = vmatpush1.msra.mxu0 %v1059
    %1270 = vmatprep.subr.mxu0 0.0
    %1271 = vmatpush1.msra.mxu0 %v1062
    %1272 = vmatprep.subr.mxu0 0.0
    %1273 = vmatpush1.msra.mxu0 %v1065
    %1274 = vmatprep.subr.mxu0 0.0
    %1275 = vmatpush1.msra.mxu0 %v1068
    %1276 = vmatprep.subr.mxu0 0.0
    %1277 = vmatpush1.msra.mxu0 %v1071
    %1278 = vmatprep.subr.mxu0 0.0
    %1279 = vmatpush1.msra.mxu0 %v1074
    %1280 = vmatprep.subr.mxu0 0.0
    %1281 = vmatpush1.msra.mxu0 %v1077
    %1282 = vmatprep.subr.mxu0 0.0
    %1283 = vmatpush1.msra.mxu0 %v1080
    %1284 = vmatprep.subr.mxu0 0.0
    %1285 = vmatpush1.msra.mxu0 %v1083
    %1286 = vmatprep.subr.mxu0 0.0
    %1287 = vmatpush1.msra.mxu0 %v1086
    %1288 = vmatprep.subr.mxu0 0.0
    %1289 = vmatpush1.msra.mxu0 %v1089
    %1290 = vmatprep.subr.mxu0 0.0
    %1291 = vmatpush1.msra.mxu0 %v1092
    %1292 = vmatprep.subr.mxu0 0.0
    %1293 = vmatpush1.msra.mxu0 %v1095
    %1294 = vmatprep.subr.mxu0 0.0
    %1295 = vmatpush1.msra.mxu0 %v1098
    %1296 = vmatprep.subr.mxu0 0.0
    %1297 = vmatpush1.msra.mxu0 %v1101
    %1298 = vmatprep.subr.mxu0 0.0
    %1299 = vmatpush1.msra.mxu0 %v1104
    %1300 = vmatprep.subr.mxu0 0.0
    %1301 = vmatpush1.msra.mxu0 %v1107
    %1302 = vmatprep.subr.mxu0 0.0
    %1303 = vmatpush1.msra.mxu0 0.0
    %1304 = vmatprep.subr.mxu0 0.0
    %1305 = vmatpush1.msra.mxu0 0.0
    %1306 = vmatprep.subr.mxu0 0.0
    %1307 = vmatpush1.msra.mxu0 0.0
    %1308 = vmatprep.subr.mxu0 0.0
    %1309 = vmatpush1.msra.mxu0 0.0
    %1310 = vmatprep.subr.mxu0 0.0
    %1311 = vmatpush1.msra.mxu0 0.0
    %1312 = vmatprep.subr.mxu0 0.0
    %1313 = vmatpush1.msra.mxu0 0.0
    %1314 = vmatprep.subr.mxu0 0.0
    %1315 = vmatpush1.msra.mxu0 0.0
    %1316 = vmatprep.subr.mxu0 0.0
    %1317 = vmatpush1.msra.mxu0 0.0
    %1318 = vmatprep.subr.mxu0 0.0
    %1319 = vmatpush1.msra.mxu0 0.0
    %1320 = vmatprep.subr.mxu0 0.0
    %1321 = vmatpush1.msra.mxu0 0.0
    %1322 = vmatprep.subr.mxu0 0.0
    %1323 = vmatpush1.msra.mxu0 0.0
    %1324 = vmatprep.subr.mxu0 0.0
    %1325 = vmatpush1.msra.mxu0 0.0
    %1326 = vmatprep.mubr.f32.mxu0 %v1126
    %1327 = vmatmul.mubr.f32.gmra.mrb[0].mxu0 %v1040
    %v1328 = vpop.f32.mrb[0].mxu0
    %v1329 = vadd.f32 %v1121, %v1328
    %v1330 = vpop.f32.mrb[0].mxu0
    %1331 = vmatprep.mubr.f32.mxu0 %v1129
    %1332 = vmatmul.mubr.f32.gmra.mrb[0].mxu0 %v1041
    %v1333 = vpop.f32.mrb[0].mxu0
    %v1334 = vadd.f32 %v1121, %v1333
    %v1335 = vpop.f32.mrb[0].mxu0
    %1336 = vmatprep.mubr.f32.mxu0 %v1132
    %1337 = vmatmul.mubr.f32.gmra.mrb[0].mxu0 %v1042
    %v1338 = vpop.f32.mrb[0].mxu0
    %v1339 = vadd.f32 %v1121, %v1338
    %v1340 = vpop.f32.mrb[0].mxu0
    %1341 = vmatprep.mubr.f32.mxu0 %v1135
    %1342 = vmatmul.mubr.f32.gmra.mrb[0].mxu0 %v1043
    %v1343 = vpop.f32.mrb[0].mxu0
    %v1344 = vadd.f32 %v1121, %v1343
    %v1345 = vpop.f32.mrb[0].mxu0
    %1346 = vmatprep.mubr.f32.mxu0 %v1138
    %1347 = vmatmul.mubr.f32.gmra.mrb[0].mxu0 %v1044
    %v1348 = vpop.f32.mrb[0].mxu0
    %v1349 = vadd.f32 %v1121, %v1348
    %v1350 = vpop.f32.mrb[0].mxu0
    %1351 = vmatprep.mubr.f32.mxu0 %v1141
    %1352 = vmatmul.mubr.f32.gmra.mrb[0].mxu0 %v1045
    %v1353 = vpop.f32.mrb[0].mxu0
    %v1354 = vadd.f32 %v1121, %v1353
    %v1355 = vpop.f32.mrb[0].mxu0
    %1356 = vmatprep.mubr.f32.mxu0 %v1144
    %1357 = vmatmul.mubr.f32.gmra.mrb[0].mxu0 %v1046
    %v1358 = vpop.f32.mrb[0].mxu0
    %v1359 = vadd.f32 %v1121, %v1358
    %v1360 = vpop.f32.mrb[0].mxu0
    %1361 = vmatprep.mubr.f32.mxu0 %v1147
    %1362 = vmatmul.mubr.f32.gmra.mrb[0].mxu0 %v1047
    %v1363 = vpop.f32.mrb[0].mxu0
    %v1364 = vadd.f32 %v1121, %v1363
    %v1365 = vpop.f32.mrb[0].mxu0
    %1366 = vdwg.mxu0
    %v1367 = vmax.f32 %v1216, 0.0
    %v1368 = vmax.f32 %v1218, 0.0
    %v1369 = vmax.f32 %v1329, 0.0
    %v1370 = vmax.f32 %v1222, 0.0
    %v1371 = vmax.f32 %v1224, 0.0
    %v1372 = vmax.f32 %v1334, 0.0
    %v1373 = vmax.f32 %v1228, 0.0
    %v1374 = vmax.f32 %v1230, 0.0
    %v1375 = vmax.f32 %v1339, 0.0
    %v1376 = vmax.f32 %v1234, 0.0
    %v1377 = vmax.f32 %v1236, 0.0
    %v1378 = vmax.f32 %v1344, 0.0
    %v1379 = vmax.f32 %v1240, 0.0
    %v1380 = vmax.f32 %v1242, 0.0
    %v1381 = vmax.f32 %v1349, 0.0
    %v1382 = vmax.f32 %v1246, 0.0
    %v1383 = vmax.f32 %v1248, 0.0
    %v1384 = vmax.f32 %v1354, 0.0
    %v1385 = vmax.f32 %v1252, 0.0
    %v1386 = vmax.f32 %v1254, 0.0
    %v1387 = vmax.f32 %v1359, 0.0
    %v1388 = vmax.f32 %v1258, 0.0
    %v1389 = vmax.f32 %v1260, 0.0
    %v1390 = vmax.f32 %v1364, 0.0
    %v1391 = vld [vmem:[%s4] sm:$0xff]
    %v1392 = vld [vmem:[%s4 + $0x8] sm:$0xff]
    %v1393 = vld [vmem:[%s4 + $0x10] sm:$0xff]
    %v1394 = vld [vmem:[%s4 + $0x18] sm:$0xff]
    %v1395 = vld [vmem:[%s4 + $0x20] sm:$0xff]
    %v1396 = vld [vmem:[%s4 + $0x28] sm:$0xff]
    %v1397 = vmul.f32 %v1367, %v1391
    %v1398 = vmul.f32 %v1368, %v1392
    %v1399 = vmul.f32 %v1369, %v1393
    %v1400 = vmul.f32 %v1370, %v1394
    %v1401 = vmul.f32 %v1371, %v1395
    %v1402 = vmul.f32 %v1372, %v1396
    %v1403 = vmul.f32 %v1373, %v1391
    %v1404 = vmul.f32 %v1374, %v1392
    %v1405 = vmul.f32 %v1375, %v1393
    %v1406 = vmul.f32 %v1376, %v1394
    %v1407 = vmul.f32 %v1377, %v1395
    %v1408 = vmul.f32 %v1378, %v1396
    %v1409 = vmul.f32 %v1379, %v1391
    %v1410 = vmul.f32 %v1380, %v1392
    %v1411 = vmul.f32 %v1381, %v1393
    %v1412 = vmul.f32 %v1382, %v1394
    %v1413 = vmul.f32 %v1383, %v1395
    %v1414 = vmul.f32 %v1384, %v1396
    %v1415 = vmul.f32 %v1385, %v1391
    %v1416 = vmul.f32 %v1386, %v1392
    %v1417 = vmul.f32 %v1387, %v1393
    %v1418 = vmul.f32 %v1388, %v1394
    %v1419 = vmul.f32 %v1389, %v1395
    %v1420 = vmul.f32 %v1390, %v1396
    %v1421 = vmax.f32 %v1397, %v1400
    %v1422 = vrot.slane %v1421, 4
    %v1423 = vmax.f32 %v1421, %v1422
    %v1424 = vrot.slane %v1423, 2
    %v1425 = vmax.f32 %v1423, %v1424
    %v1426 = vrot.slane %v1425, 1
    %v1427 = vmax.f32 %v1425, %v1426
    %v1428 = vmax.f32 %v1398, %v1401
    %v1429 = vrot.slane %v1428, 4
    %v1430 = vmax.f32 %v1428, %v1429
    %v1431 = vrot.slane %v1430, 2
    %v1432 = vmax.f32 %v1430, %v1431
    %v1433 = vrot.slane %v1432, 1
    %v1434 = vmax.f32 %v1432, %v1433
    %v1435 = vmax.f32 %v1399, %v1402
    %v1436 = vrot.slane %v1435, 4
    %v1437 = vmax.f32 %v1435, %v1436
    %v1438 = vrot.slane %v1437, 2
    %v1439 = vmax.f32 %v1437, %v1438
    %v1440 = vrot.slane %v1439, 1
    %v1441 = vmax.f32 %v1439, %v1440
    %v1442 = vmax.f32 %v1403, %v1406
    %v1443 = vrot.slane %v1442, 4
    %v1444 = vmax.f32 %v1442, %v1443
    %v1445 = vrot.slane %v1444, 2
    %v1446 = vmax.f32 %v1444, %v1445
    %v1447 = vrot.slane %v1446, 1
    %v1448 = vmax.f32 %v1446, %v1447
    %v1449 = vmax.f32 %v1404, %v1407
    %v1450 = vrot.slane %v1449, 4
    %v1451 = vmax.f32 %v1449, %v1450
    %v1452 = vrot.slane %v1451, 2
    %v1453 = vmax.f32 %v1451, %v1452
    %v1454 = vrot.slane %v1453, 1
    %v1455 = vmax.f32 %v1453, %v1454
    %v1456 = vmax.f32 %v1405, %v1408
    %v1457 = vrot.slane %v1456, 4
    %v1458 = vmax.f32 %v1456, %v1457
    %v1459 = vrot.slane %v1458, 2
    %v1460 = vmax.f32 %v1458, %v1459
    %v1461 = vrot.slane %v1460, 1
    %v1462 = vmax.f32 %v1460, %v1461
    %v1463 = vmax.f32 %v1409, %v1412
    %v1464 = vrot.slane %v1463, 4
    %v1465 = vmax.f32 %v1463, %v1464
    %v1466 = vrot.slane %v1465, 2
    %v1467 = vmax.f32 %v1465, %v1466
    %v1468 = vrot.slane %v1467, 1
    %v1469 = vmax.f32 %v1467, %v1468
    %v1470 = vmax.f32 %v1410, %v1413
    %v1471 = vrot.slane %v1470, 4
    %v1472 = vmax.f32 %v1470, %v1471
    %v1473 = vrot.slane %v1472, 2
    %v1474 = vmax.f32 %v1472, %v1473
    %v1475 = vrot.slane %v1474, 1
    %v1476 = vmax.f32 %v1474, %v1475
    %v1477 = vmax.f32 %v1411, %v1414
    %v1478 = vrot.slane %v1477, 4
    %v1479 = vmax.f32 %v1477, %v1478
    %v1480 = vrot.slane %v1479, 2
    %v1481 = vmax.f32 %v1479, %v1480
    %v1482 = vrot.slane %v1481, 1
    %v1483 = vmax.f32 %v1481, %v1482
    %v1484 = vmax.f32 %v1415, %v1418
    %v1485 = vrot.slane %v1484, 4
    %v1486 = vmax.f32 %v1484, %v1485
    %v1487 = vrot.slane %v1486, 2
    %v1488 = vmax.f32 %v1486, %v1487
    %v1489 = vrot.slane %v1488, 1
    %v1490 = vmax.f32 %v1488, %v1489
    %v1491 = vmax.f32 %v1416, %v1419
    %v1492 = vrot.slane %v1491, 4
    %v1493 = vmax.f32 %v1491, %v1492
    %v1494 = vrot.slane %v1493, 2
    %v1495 = vmax.f32 %v1493, %v1494
    %v1496 = vrot.slane %v1495, 1
    %v1497 = vmax.f32 %v1495, %v1496
    %v1498 = vmax.f32 %v1417, %v1420
    %v1499 = vrot.slane %v1498, 4
    %v1500 = vmax.f32 %v1498, %v1499
    %v1501 = vrot.slane %v1500, 2
    %v1502 = vmax.f32 %v1500, %v1501
    %v1503 = vrot.slane %v1502, 1
    %v1504 = vmax.f32 %v1502, %v1503
    %v1505 = vld [vmem:[%s5] sm:$0xff]
    %v1506 = vld [vmem:[%s5 + $0x8] sm:$0xff]
    %v1507 = vld [vmem:[%s5 + $0x10] sm:$0xff]
    %v1508 = vld [vmem:[%s5 + $0x18] sm:$0xff]
    %v1509 = vld [vmem:[%s5 + $0x20] sm:$0xff]
    %v1510 = vld [vmem:[%s5 + $0x28] sm:$0xff]
    %v1511 = vld [vmem:[%s5 + $0x30] sm:$0xff]
    %v1512 = vld [vmem:[%s5 + $0x38] sm:$0xff]
    %v1513 = vld [vmem:[%s5 + $0x40] sm:$0xff]
    %v1514 = vld [vmem:[%s5 + $0x48] sm:$0xff]
    %v1515 = vld [vmem:[%s5 + $0x50] sm:$0xff]
    %v1516 = vld [vmem:[%s5 + $0x58] sm:$0xff]
    %v1517 = vld [vmem:[%s5 + $0x60] sm:$0xff]
    %v1518 = vld [vmem:[%s5 + $0x68] sm:$0xff]
    %v1519 = vld [vmem:[%s5 + $0x70] sm:$0xff]
    %v1520 = vld [vmem:[%s5 + $0x78] sm:$0xff]
    %v1521 = vld [vmem:[%s5 + $0x80] sm:$0xff]
    %v1522 = vld [vmem:[%s5 + $0x88] sm:$0xff]
    %v1523 = vld [vmem:[%s5 + $0x90] sm:$0xff]
    %v1524 = vld [vmem:[%s5 + $0x98] sm:$0xff]
    %v1525 = vld [vmem:[%s5 + $0xa0] sm:$0xff]
    %v1526 = vld [vmem:[%s5 + $0xa8] sm:$0xff]
    %v1527 = vld [vmem:[%s5 + $0xb0] sm:$0xff]
    %v1528 = vld [vmem:[%s5 + $0xb8] sm:$0xff]
    %v1529 = vld [vmem:[%s5 + $0xc0] sm:$0xff]
    %v1530 = vld [vmem:[%s5 + $0xc8] sm:$0xff]
    %v1531 = vld [vmem:[%s5 + $0xd0] sm:$0xff]
    %v1532 = vld [vmem:[%s5 + $0xd8] sm:$0xff]
    %v1533 = vld [vmem:[%s5 + $0xe0] sm:$0xff]
    %v1534 = vld [vmem:[%s5 + $0xe8] sm:$0xff]
    %v1535 = vld [vmem:[%s5 + $0xf0] sm:$0xff]
    %v1536 = vld [vmem:[%s5 + $0xf8] sm:$0xff]
    %v1537 = vld [vmem:[%s5 + $0x100] sm:$0xff]
    %v1538 = vld [vmem:[%s5 + $0x108] sm:$0xff]
    %v1539 = vld [vmem:[%s5 + $0x110] sm:$0xff]
    %v1540 = vld [vmem:[%s5 + $0x118] sm:$0xff]
    %v1541 = vld [vmem:[%s5 + $0x120] sm:$0xff]
    %v1542 = vld [vmem:[%s5 + $0x128] sm:$0xff]
    %v1543 = vld [vmem:[%s5 + $0x130] sm:$0xff]
    %v1544 = vld [vmem:[%s5 + $0x138] sm:$0xff]
    %v1545 = vld [vmem:[%s5 + $0x140] sm:$0xff]
    %v1546 = vld [vmem:[%s5 + $0x148] sm:$0xff]
    %v1547 = vld [vmem:[%s5 + $0x150] sm:$0xff]
    %v1548 = vld [vmem:[%s5 + $0x158] sm:$0xff]
    %v1549 = vld [vmem:[%s5 + $0x160] sm:$0xff]
    %v1550 = vld [vmem:[%s5 + $0x168] sm:$0xff]
    %v1551 = vld [vmem:[%s5 + $0x170] sm:$0xff]
    %v1552 = vld [vmem:[%s5 + $0x178] sm:$0xff]
    %v1553 = vld [vmem:[%s6] sm:$0x1]
    %v1555 = vlaneseq
    %v1556 = vshrl.u32 %v1555, 7
    %v1557 = vsub.s32 0, %v1556
    %v1558 = vrot.slane %v1553, %v1557
    %vm1572 = vcmask 1041409
    %v1573 = vsel %vm1572, %v1448, %v1427
    %vm1574 = vcmask 1042434
    %v1575 = vsel %vm1574, %v1469, %v1573
    %vm1576 = vcmask 1043459
    %v1577 = vsel %vm1576, %v1490, %v1575
    %v1578 = vsel %vm1572, %v1455, %v1434
    %v1579 = vsel %vm1574, %v1476, %v1578
    %v1580 = vsel %vm1576, %v1497, %v1579
    %v1581 = vsel %vm1572, %v1462, %v1441
    %v1582 = vsel %vm1574, %v1483, %v1581
    %v1583 = vsel %vm1576, %v1504, %v1582
    %1587 = vmatprep.subr.mxu0 0.0
    %1588 = vmatpush1.msra.mxu0 %v1505
    %1589 = vmatprep.subr.mxu0 0.0
    %1590 = vmatpush1.msra.mxu0 %v1506
    %1591 = vmatprep.subr.mxu0 0.0
    %1592 = vmatpush1.msra.mxu0 %v1507
    %1593 = vmatprep.subr.mxu0 0.0
    %1594 = vmatpush1.msra.mxu0 %v1508
    %1595 = vmatprep.subr.mxu0 0.0
    %1596 = vmatpush1.msra.mxu0 %v1509
    %1597 = vmatprep.subr.mxu0 0.0
    %1598 = vmatpush1.msra.mxu0 %v1510
    %1599 = vmatprep.subr.mxu0 0.0
    %1600 = vmatpush1.msra.mxu0 %v1511
    %1601 = vmatprep.subr.mxu0 0.0
    %1602 = vmatpush1.msra.mxu0 %v1512
    %1603 = vmatprep.subr.mxu0 0.0
    %1604 = vmatpush1.msra.mxu0 %v1513
    %1605 = vmatprep.subr.mxu0 0.0
    %1606 = vmatpush1.msra.mxu0 %v1514
    %1607 = vmatprep.subr.mxu0 0.0
    %1608 = vmatpush1.msra.mxu0 %v1515
    %1609 = vmatprep.subr.mxu0 0.0
    %1610 = vmatpush1.msra.mxu0 %v1516
    %1611 = vmatprep.subr.mxu0 0.0
    %1612 = vmatpush1.msra.mxu0 %v1517
    %1613 = vmatprep.subr.mxu0 0.0
    %1614 = vmatpush1.msra.mxu0 %v1518
    %1615 = vmatprep.subr.mxu0 0.0
    %1616 = vmatpush1.msra.mxu0 %v1519
    %1617 = vmatprep.subr.mxu0 0.0
    %1618 = vmatpush1.msra.mxu0 %v1520
    %1619 = vmatprep.subr.mxu0 0.0
    %1620 = vmatpush1.msra.mxu0 %v1521
    %1621 = vmatprep.subr.mxu0 0.0
    %1622 = vmatpush1.msra.mxu0 %v1522
    %1623 = vmatprep.subr.mxu0 0.0
    %1624 = vmatpush1.msra.mxu0 %v1523
    %1625 = vmatprep.subr.mxu0 0.0
    %1626 = vmatpush1.msra.mxu0 %v1524
    %1627 = vmatprep.subr.mxu0 0.0
    %1628 = vmatpush1.msra.mxu0 %v1525
    %1629 = vmatprep.subr.mxu0 0.0
    %1630 = vmatpush1.msra.mxu0 %v1526
    %1631 = vmatprep.subr.mxu0 0.0
    %1632 = vmatpush1.msra.mxu0 %v1527
    %1633 = vmatprep.subr.mxu0 0.0
    %1634 = vmatpush1.msra.mxu0 %v1528
    %1635 = vmatprep.subr.mxu0 0.0
    %1636 = vmatpush1.msra.mxu0 %v1529
    %1637 = vmatprep.subr.mxu0 0.0
    %1638 = vmatpush1.msra.mxu0 %v1530
    %1639 = vmatprep.subr.mxu0 0.0
    %1640 = vmatpush1.msra.mxu0 %v1531
    %1641 = vmatprep.subr.mxu0 0.0
    %1642 = vmatpush1.msra.mxu0 %v1532
    %1643 = vmatprep.subr.mxu0 0.0
    %1644 = vmatpush1.msra.mxu0 %v1533
    %1645 = vmatprep.subr.mxu0 0.0
    %1646 = vmatpush1.msra.mxu0 %v1534
    %1647 = vmatprep.subr.mxu0 0.0
    %1648 = vmatpush1.msra.mxu0 %v1535
    %1649 = vmatprep.subr.mxu0 0.0
    %1650 = vmatpush1.msra.mxu0 %v1536
    %1651 = vmatprep.mubr.f32.mxu0 %v1580
    %1652 = vmatmul.mubr.f32.gmra.mrb[0].mxu0 %v1577
    %v1653 = vpop.f32.mrb[0].mxu0
    %v1654 = vadd.f32 %v1558, %v1653
    %v1655 = vpop.f32.mrb[0].mxu0
    %1656 = vdwg.mxu0
    %1657 = vmatprep.subr.mxu0 0.0
    %1658 = vmatpush1.msra.mxu0 %v1537
    %1659 = vmatprep.subr.mxu0 0.0
    %1660 = vmatpush1.msra.mxu0 %v1538
    %1661 = vmatprep.subr.mxu0 0.0
    %1662 = vmatpush1.msra.mxu0 %v1539
    %1663 = vmatprep.subr.mxu0 0.0
    %1664 = vmatpush1.msra.mxu0 %v1540
    %1665 = vmatprep.subr.mxu0 0.0
    %1666 = vmatpush1.msra.mxu0 %v1541
    %1667 = vmatprep.subr.mxu0 0.0
    %1668 = vmatpush1.msra.mxu0 %v1542
    %1669 = vmatprep.subr.mxu0 0.0
    %1670 = vmatpush1.msra.mxu0 %v1543
    %1671 = vmatprep.subr.mxu0 0.0
    %1672 = vmatpush1.msra.mxu0 %v1544
    %1673 = vmatprep.subr.mxu0 0.0
    %1674 = vmatpush1.msra.mxu0 %v1545
    %1675 = vmatprep.subr.mxu0 0.0
    %1676 = vmatpush1.msra.mxu0 %v1546
    %1677 = vmatprep.subr.mxu0 0.0
    %1678 = vmatpush1.msra.mxu0 %v1547
    %1679 = vmatprep.subr.mxu0 0.0
    %1680 = vmatpush1.msra.mxu0 %v1548
    %1681 = vmatprep.subr.mxu0 0.0
    %1682 = vmatpush1.msra.mxu0 %v1549
    %1683 = vmatprep.subr.mxu0 0.0
    %1684 = vmatpush1.msra.mxu0 %v1550
    %1685 = vmatprep.subr.mxu0 0.0
    %1686 = vmatpush1.msra.mxu0 %v1551
    %1687 = vmatprep.subr.mxu0 0.0
    %1688 = vmatpush1.msra.mxu0 %v1552
    %1689 = vmatprep.subr.mxu0 0.0
    %1690 = vmatpush1.msra.mxu0 0.0
    %1691 = vmatprep.subr.mxu0 0.0
    %1692 = vmatpush1.msra.mxu0 0.0
    %1693 = vmatprep.subr.mxu0 0.0
    %1694 = vmatpush1.msra.mxu0 0.0
    %1695 = vmatprep.subr.mxu0 0.0
    %1696 = vmatpush1.msra.mxu0 0.0
    %1697 = vmatprep.subr.mxu0 0.0
    %1698 = vmatpush1.msra.mxu0 0.0
    %1699 = vmatprep.subr.mxu0 0.0
    %1700 = vmatpush1.msra.mxu0 0.0
    %1701 = vmatprep.subr.mxu0 0.0
    %1702 = vmatpush1.msra.mxu0 0.0
    %1703 = vmatprep.subr.mxu0 0.0
    %1704 = vmatpush1.msra.mxu0 0.0
    %1705 = vmatprep.subr.mxu0 0.0
    %1706 = vmatpush1.msra.mxu0 0.0
    %1707 = vmatprep.subr.mxu0 0.0
    %1708 = vmatpush1.msra.mxu0 0.0
    %1709 = vmatprep.subr.mxu0 0.0
    %1710 = vmatpush1.msra.mxu0 0.0
    %1711 = vmatprep.subr.mxu0 0.0
    %1712 = vmatpush1.msra.mxu0 0.0
    %1713 = vmatprep.subr.mxu0 0.0
    %1714 = vmatpush1.msra.mxu0 0.0
    %1715 = vmatprep.subr.mxu0 0.0
    %1716 = vmatpush1.msra.mxu0 0.0
    %1717 = vmatprep.subr.mxu0 0.0
    %1718 = vmatpush1.msra.mxu0 0.0
    %1719 = vmatprep.subr.mxu0 0.0
    %1720 = vmatpush1.msra.mxu0 0.0
    %1721 = vmatprep.mubr.f32.mxu0 0.0
    %1722 = vmatmul.mubr.f32.gmra.mrb[0].mxu0 %v1583
    %v1723 = vpop.f32.mrb[0].mxu0
    %v1724 = vadd.f32 %v1654, %v1723
    %v1725 = vpop.f32.mrb[0].mxu0
    %1726 = vdwg.mxu0
    %1727 = vst [vmem:[#allocation2] sm:$0xf] %v1724
    %vm1728 = vcmp.lt.s32.totalorder %v51, 8
    %v1729 = vsel %vm1728, %v1724, -1e+30
    %vm1730 = vcmask 1043456
    %v1731 = vsel %vm1730, %v1729, -inf
    %1732 = vmax.xlane.f32.xlu0 %v1731
    %v1733 = vpop.xlane.xlu0 %1732
    %v1734 = vsub.f32 %v1729, %v1733
    %v1735 = vmul.f32 %v1734, 1.442695
    %v1736 = vpow.pop %v1735
    %v1737 = vsel %vm1730, %v1736, 0.0
    %1738 = vadd.xlane.f32.xlu0 %v1737
    %v1739 = vpop.xlane.xlu0 %1738
    %v1740 = vlog2.pop %v1739
    %v1741 = vmul.f32 %v1740, 0.6931472
    %v1742 = vadd.f32 %v1741, %v1733
    %v1743 = vld [vmem:[%s7] sm:$0xf]
    %1744 = vset.pattern.permute.xlu0 0
    %1745 = vperm.xlu0 %1744, %v1743
    %v1746 = vpop.permute.xlu0 %1745
    %vm1747 = vcmp.eq.s32.totalorder %v51, %v1746
    %v1748 = vsel %vm1747, 1, 0
    %v1749 = vcvt.s32.f32 %v1748
    %v1750 = vmul.f32 %v1749, %v1724
    %v1751 = vsel %vm1730, %v1750, 0.0
    %1752 = vadd.xlane.f32.xlu0 %v1751
    %v1753 = vpop.xlane.xlu0 %1752
    %v1754 = vsub.f32 %v1742, %v1753
    %v1755 = vsel %vm1730, %v1754, 0.0
    %v1756 = vrot.slane %v1755, 4
    %v1757 = vadd.f32 %v1755, %v1756
    %v1758 = vrot.slane %v1757, 2
    %v1759 = vadd.f32 %v1757, %v1758
    %v1760 = vrot.slane %v1759, 1
    %v1761 = vadd.f32 %v1759, %v1760
    %v1762 = vrcp.pop 4.0
    %v1763 = vmul.f32 %v1761, %v1762
    %vm1764 = vcmask 0
    %1765 = vst.msk [vmem:[#allocation4] sm:$0x1] %vm1764, %v1763
    // Predicated region
    $region34: #{text_cnn_forward.1} parent=1 // pred_check
      _
    $region35: #{text_cnn_forward.1} parent=1 // pred_check_branch
      %1767 = sbr.rel (0) target = $region37
    $region36: #{text_cnn_forward.1} parent=1 // pred_region
      %s1769 = ssub.s32 64, 64
      %1770 = vsyncadd [#allocation3], %s1769
      %s1772 = sshll.u32 [#allocation2], 4
      %s1773 = int_to_ptr.vmem [resolvable:$true] %s1772
      %1775 = dma.vmem_to_hbm [thread:$0]  %s1773, 64, %s8, [#allocation3]
    $region37: #{text_cnn_forward.1} parent=1 // pred_fallthru
      _
    // Predicated region
    $region38: #{text_cnn_forward.1} parent=1 // pred_check
      _
    $region39: #{text_cnn_forward.1} parent=1 // pred_check_branch
      %1777 = sbr.rel (0) target = $region41
    $region40: #{text_cnn_forward.1} parent=1 // pred_region
      %s1779 = ssub.s32 16, 16
      %1780 = vsyncadd [#allocation5], %s1779
      %s1782 = sshll.u32 [#allocation4], 4
      %s1783 = int_to_ptr.vmem [resolvable:$true] %s1782
      %1785 = dma.vmem_to_hbm [thread:$0]  %s1783, 16, %s9, [#allocation5]
    $region41: #{text_cnn_forward.1} parent=1 // pred_fallthru
      _
    // Predicated region
    $region42: #{text_cnn_forward.1} parent=1 // pred_check
      _
    $region43: #{text_cnn_forward.1} parent=1 // pred_check_branch
      %1787 = sbr.rel (0) target = $region45
    $region44: #{text_cnn_forward.1} parent=1 // pred_region
      %1788 = dma.done [#allocation3], 64
    $region45: #{text_cnn_forward.1} parent=1 // pred_fallthru
      _
    // Predicated region
    $region46: #{text_cnn_forward.1} parent=1 // pred_check
      _
    $region47: #{text_cnn_forward.1} parent=1 // pred_check_branch
      %1790 = sbr.rel (0) target = $region49
    $region48: #{text_cnn_forward.1} parent=1 // pred_region
      %1791 = dma.done [#allocation5], 16
    $region49: #{text_cnn_forward.1} parent=1 // pred_fallthru
      _
    %1792 = vsyncpa [#allocation3], 1
    %1793 = vsyncpa [#allocation5], 1

</llo_original>
